<compile_context>
chip_gen: v6e
topology: v6e:2x2x1
jax: 0.10.0
libtpu: 0.0.40
codegen_flags: <defaults>
</compile_context>

<pallas_src>
import numpy as np
from functools import partial

import jax
import jax.numpy as jnp
from jax import lax
from jax.experimental import pallas as pl
from jax.experimental.pallas import tpu as pltpu


# ----------------------------------------------------------------------------
# helpers
# ----------------------------------------------------------------------------
def _round_up(x, m):
    return ((x + m - 1) // m) * m


def _next_pow2(x):
    x = max(int(x), 1)
    return 1 << (x - 1).bit_length()


def _has_bf16_vpu():
    """bf16 element-wise chain only where the VPU/EUP support it (v6e / v7x)."""
    try:
        kind = jax.devices()[0].device_kind.lower()
    except Exception:
        return True
    for old in ("v2", "v3", "v4", "v5"):
        if old in kind:
            return False
    return True


def _pick_tiles(max_p, q_pad, t_pad, x_bytes, t_bytes, tile_p_cap,
                vmem_budget=10 << 20):
    """Choose (tile_p, tile_q, p_pad)."""
    # Lane tile: 256 exactly fills the v6e/v7x MXU; a larger padded Q is split
    # into extra *parallel* grid work (feeds both v7x TensorCores and bounds
    # the element-wise temporaries).
    tile_q = 256 if (q_pad % 256 == 0) else 128
    # Point tile: largest multiple of 128 whose double-buffered x/t windows
    # plus ~5 f32 element-wise temporaries stay inside a conservative VMEM
    # budget (fits v5e's 16 MiB default scoped VMEM; v6e/v7x have >= 32 MiB).
    per_row = 2 * tile_q * x_bytes + 2 * t_pad * t_bytes + 5 * tile_q * 4
    tile_p = (vmem_budget // per_row) // 128 * 128
    tile_p = int(max(128, min(tile_p, tile_p_cap)))
    tile_p = min(tile_p, _round_up(max_p, 128))   # don't over-pad tiny scenes
    p_pad = _round_up(max_p, tile_p)              # P padded to a tile multiple
    return tile_p, tile_q, p_pad


# ----------------------------------------------------------------------------
# Pallas kernel: batched pairwise matching cost with a tiled P reduction.
# ----------------------------------------------------------------------------
def _cost_kernel(cost_mask_w, cost_dice_w, compute_dtype,
                 inv_p_ref, x_ref, t_ref, c_ref,
                 acc_xt, acc_st, acc_sp, acc_s, acc_t):
    # program_id / num_programs / SMEM scalar reads stay at the TOP LEVEL
    # (never inside pl.when bodies) so the kernel also lowers cleanly under
    # interpret mode.
    b = pl.program_id(0)
    k = pl.program_id(2)
    k_last = pl.num_programs(2) - 1
    inv_p = inv_p_ref[b]                        # per-scene 1/num_points (SMEM)

    @pl.when(k == 0)
    def _init():
        acc_xt[...] = jnp.zeros_like(acc_xt)
        acc_st[...] = jnp.zeros_like(acc_st)
        acc_sp[...] = jnp.zeros_like(acc_sp)
        acc_s[...] = jnp.zeros_like(acc_s)
        acc_t[...] = jnp.zeros_like(acc_t)

    xm = x_ref[...]                             # (tile_p, tile_q) storage dtype
    tm = t_ref[...].astype(xm.dtype)            # (Tpad, tile_p) int8 -> matmul dtype
    x = xm.astype(compute_dtype)                # element-wise chain dtype

    # Shared transcendental e = exp(-|x|):
    #   softplus(x) = relu(x) + log(1 + e)      (== BCE-with-logits vs target 0)
    #   sigmoid(x)  = where(x >= 0, r, 1 - r),  r = 1 / (1 + e)
    e = jnp.exp(-jnp.abs(x))
    one_plus_e = 1.0 + e
    softplus = jnp.maximum(x, 0.0) + jnp.log(one_plus_e)
    r = 1.0 / one_plus_e
    sig = jnp.where(x >= 0.0, r, 1.0 - r)

    # Two MXU contractions over the point tile, f32 accumulation, no transposes.
    dn = (((1,), (0,)), ((), ()))               # contract the point dimension
    prec = lax.Precision.HIGHEST if xm.dtype == jnp.float32 else None
    acc_xt[...] += lax.dot_general(tm, xm, dn, precision=prec,
                                   preferred_element_type=jnp.float32)
    acc_st[...] += lax.dot_general(tm, sig.astype(xm.dtype), dn, precision=prec,
                                   preferred_element_type=jnp.float32)
    acc_sp[...] += jnp.sum(softplus, axis=0, keepdims=True, dtype=jnp.float32)
    acc_s[...] += jnp.sum(sig, axis=0, keepdims=True, dtype=jnp.float32)
    acc_t[...] += jnp.sum(tm, axis=1, keepdims=True, dtype=jnp.float32)

    @pl.when(k == k_last)
    def _finalize():
        # collapsed sigmoid-CE:  ce = (sum_p softplus(x) - x . t) / P
        ce = (acc_sp[...] - acc_xt[...]) * inv_p
        # dice:  1 - (2 * s.t + 1) / (sum_p s + sum_p t + 1)
        dice = 1.0 - (2.0 * acc_st[...] + 1.0) / (acc_s[...] + acc_t[...] + 1.0)
        c_ref[...] = cost_mask_w * ce + cost_dice_w * dice


def pallas_cost_matrix(x, t, inv_p, *, cost_mask=1.0, cost_dice=1.0,
                       tile_p, tile_q, compute_dtype=jnp.float32):
    """x: (B, Ppad, Qpad) logits; t: (B, Tpad, Ppad) binary masks (int8/float);
    inv_p: (B,) float32 = 1/num_points per scene.
    Returns (B, Tpad, Qpad) float32 costs in (targets, queries) orientation."""
    B, p_pad, q_pad = x.shape
    _, t_pad, p_pad2 = t.shape
    assert p_pad2 == p_pad
    assert p_pad % tile_p == 0 and q_pad % tile_q == 0 and tile_p % 128 == 0
    kp = p_pad // tile_p
    nq = q_pad // tile_q

    kernel = partial(_cost_kernel, float(cost_mask), float(cost_dice), compute_dtype)
    return pl.pallas_call(
        kernel,
        out_shape=jax.ShapeDtypeStruct((B, t_pad, q_pad), jnp.float32),
        grid_spec=pltpu.PrefetchScalarGridSpec(
            num_scalar_prefetch=1,
            grid=(B, nq, kp),                                 # P (reduction) innermost
            in_specs=[
                pl.BlockSpec((None, tile_p, tile_q), lambda b, qi, k, inv: (b, k, qi)),
                pl.BlockSpec((None, t_pad, tile_p), lambda b, qi, k, inv: (b, 0, k)),
            ],
            out_specs=pl.BlockSpec((None, t_pad, tile_q),
                                   lambda b, qi, k, inv: (b, 0, qi)),
            scratch_shapes=[pltpu.VMEM((t_pad, tile_q), jnp.float32),  # acc: t @ x
                            pltpu.VMEM((t_pad, tile_q), jnp.float32),  # acc: t @ sig(x)
                            pltpu.VMEM((1, tile_q), jnp.float32),      # acc: sum_p softplus
                            pltpu.VMEM((1, tile_q), jnp.float32),      # acc: sum_p sig
                            pltpu.VMEM((t_pad, 1), jnp.float32)],      # acc: sum_p t
        ),
        compiler_params=pltpu.CompilerParams(
            dimension_semantics=("parallel", "parallel", "arbitrary"),
            # <= default scoped VMEM on v6e/v7x, raises v5e's 16 MiB default so
            # bigger point tiles fit; tile selection keeps usage well below it.
            vmem_limit_bytes=32 * 1024 * 1024,
        ),
    )(inv_p, x, t)


# ----------------------------------------------------------------------------
# Host-side linear sum assignment (lapjv replacement).
# ----------------------------------------------------------------------------
def LSA(cost_matrix):
    # TODO(synk): lapjv (Jonker-Volgenant) is a sequential combinatorial solver
    # with no clean Pallas equivalent; solved on host (scipy if available,
    # greedy fallback otherwise).
    cost_matrix = np.asarray(cost_matrix, dtype=np.float64)
    i, j = cost_matrix.shape
    try:
        from scipy.optimize import linear_sum_assignment

        if i == j:
            r, c = linear_sum_assignment(cost_matrix)
            order = np.argsort(r)
            return (r[order].astype(np.int64), c[order].astype(np.int64))
        elif i > j:
            padded = np.concatenate(
                [cost_matrix, np.full((i, i - j), 100.0)], axis=1)
            r, c = linear_sum_assignment(padded)
            col_to_row = np.empty(i, dtype=np.int64)
            col_to_row[c] = r
            return (col_to_row[:j], np.arange(j, dtype=np.int64))
        else:
            padded = np.concatenate(
                [cost_matrix, np.full((j - i, j), 100.0)], axis=0)
            r, c = linear_sum_assignment(padded)
            row_to_col = np.empty(j, dtype=np.int64)
            row_to_col[r] = c
            return (np.arange(i, dtype=np.int64), row_to_col[:i])
    except ImportError:
        # Greedy approximation (not guaranteed optimal).
        C = cost_matrix.copy()
        n = min(i, j)
        rows, cols = [], []
        for _ in range(n):
            r, c = np.unravel_index(np.argmin(C), C.shape)
            rows.append(r)
            cols.append(c)
            C[r, :] = np.inf
            C[:, c] = np.inf
        rows = np.asarray(rows, np.int64)
        cols = np.asarray(cols, np.int64)
        order = np.argsort(cols)
        return (rows[order], cols[order])


# ----------------------------------------------------------------------------
# HungarianMatcher (JAX / Pallas version of the torch module).
# ----------------------------------------------------------------------------
class HungarianMatcher:
    def __init__(self, cost_class: float = 1, cost_mask: float = 1,
                 cost_dice: float = 1, num_points: int = -1,
                 *, tile_p: int = 4096, use_bf16: bool = True,
                 int8_targets: bool = True, compute_in_bf16=None):
        # TODO(synk): cost_class is unused on the unsupervised path (matches torch ref).
        self.cost_class = cost_class
        self.cost_mask = cost_mask
        self.cost_dice = cost_dice
        assert cost_class != 0 or cost_mask != 0 or cost_dice != 0, \
            "all costs cant be 0"
        self.num_points = num_points
        self.tile_p_cap = int(tile_p)          # cap on the point tile
        self.use_bf16 = bool(use_bf16)         # bf16 HBM storage for logits
        # int8 target storage assumes binary masks (Mask3D); halves t traffic.
        self.int8_targets = bool(int8_targets)
        if compute_in_bf16 is None:            # bf16 chain on v6e/v7x, f32 on v5e-
            compute_in_bf16 = self.use_bf16 and _has_bf16_vpu()
        self.compute_dtype = jnp.bfloat16 if compute_in_bf16 else jnp.float32

    # Batched cost-matrix computation: one pallas_call + one D2H for all scenes.
    def _cost_matrices(self, pred_masks, targets, mask_type):
        bs = len(targets)
        xs, ts, p_real, t_real = [], [], [], []
        for b in range(bs):
            pm = jnp.asarray(pred_masks[b], jnp.float32)            # (P_b, Q), points-major
            tg = jnp.asarray(targets[b][mask_type], jnp.float32)    # (T_b, P_b)
            if self.num_points != -1:
                n_pts = int(self.num_points * tg.shape[1])
                # TODO(synk): deterministic stand-in for torch.randperm point sampling.
                perm = jax.random.permutation(
                    jax.random.PRNGKey(b), tg.shape[1])[:n_pts]
                pm = pm[perm, :]
                tg = tg[:, perm]
            xs.append(pm)
            ts.append(tg)
            p_real.append(max(int(pm.shape[0]), 1))
            t_real.append(int(tg.shape[0]))

        q = int(xs[0].shape[1])
        # Bucketed, lane/sublane-friendly padded shapes (keeps recompiles rare).
        q_pad = _round_up(max(q, 1), 128)
        t_pad = max(32, _next_pow2(max(max(t_real), 1)))
        x_dtype = jnp.bfloat16 if self.use_bf16 else jnp.float32
        t_dtype = jnp.int8 if self.int8_targets else x_dtype
        tile_p, tile_q, p_pad = _pick_tiles(
            max(p_real), q_pad, t_pad,
            jnp.dtype(x_dtype).itemsize, jnp.dtype(t_dtype).itemsize,
            tile_p_cap=self.tile_p_cap)

        # Pad logits (extra points AND extra query lanes) with -1e4 so
        # softplus/sigmoid of padding are exactly 0; pad targets with 0 so
        # padded points/targets contribute nothing.
        NEG = -1e4
        xb = jnp.stack([
            jnp.pad(xs[b], ((0, p_pad - p_real[b]), (0, q_pad - q)),
                    constant_values=NEG).astype(x_dtype)
            for b in range(bs)])
        tb = jnp.stack([
            jnp.pad(ts[b], ((0, t_pad - t_real[b]), (0, p_pad - p_real[b])))
               .astype(t_dtype)
            for b in range(bs)])
        inv_p = jnp.asarray([1.0 / p for p in p_real], jnp.float32)

        c_all = pallas_cost_matrix(xb, tb, inv_p,
                                   cost_mask=self.cost_mask,
                                   cost_dice=self.cost_dice,
                                   tile_p=tile_p, tile_q=tile_q,
                                   compute_dtype=self.compute_dtype)
        # Single device -> host transfer for the whole batch.
        c_all = np.asarray(jax.device_get(jax.block_until_ready(c_all)), np.float64)
        # Host-side slice/transpose of the tiny (T, Q) slabs back to torch's (Q, T).
        return [c_all[b, :t_real[b], :q].T for b in range(bs)]

    def unsupervised_forward(self, pred_masks, targets, mask_type):
        costs = self._cost_matrices(pred_masks, targets, mask_type)
        indices = []
        for C in costs:
            if C.shape[1] == 0:
                indices.append((np.zeros(0, np.int64), np.zeros(0, np.int64)))
            else:
                indices.append(LSA(C))
        return [(np.asarray(i, np.int64), np.asarray(j, np.int64))
                for i, j in indices]

    def forward(self, outputs, targets, mask_type):
        pred_masks = [jnp.asarray(m, jnp.float32)
                      for m in outputs["pred_masks"]]
        return self.unsupervised_forward(pred_masks, targets, mask_type)

    __call__ = forward


# ----------------------------------------------------------------------------
# Host (numpy, float64) reference that mirrors the torch code, for validation.
# ----------------------------------------------------------------------------
def _reference_cost(pred_mask_pq, tgt_mask_tp, cost_mask, cost_dice):
    x = np.asarray(pred_mask_pq, np.float64).T        # (Q, P)
    t = np.asarray(tgt_mask_tp, np.float64)           # (T, P)
    P = x.shape[1]
    sp = np.log1p(np.exp(-np.abs(x)))
    pos = np.maximum(x, 0.0) - x + sp                  # BCE(x, 1)
    neg = np.maximum(x, 0.0) + sp                      # BCE(x, 0)
    ce = (pos @ t.T + neg @ (1.0 - t).T) / P
    s = 1.0 / (1.0 + np.exp(-x))
    num = 2.0 * (s @ t.T)
    den = s.sum(-1, keepdims=True) + t.sum(-1)[None, :]
    dice = 1.0 - (num + 1.0) / (den + 1.0)
    return cost_mask * ce + cost_dice * dice           # (Q, T)


# ----------------------------------------------------------------------------
if __name__ == "__main__":
    B, Q, T, P = 2, 16, 8, 384   # batch, queries, targets, points

    key = jax.random.PRNGKey(0)
    k_pred, k_tgt = jax.random.split(key)

    # pred_masks[b]: (points, num_queries) logits — native Mask3D layout.
    pred_masks = [jax.random.normal(jax.random.fold_in(k_pred, b), (P, Q),
                                    dtype=jnp.float32) for b in range(B)]
    # targets[b]["masks"]: (num_targets, points) binary masks.
    targets = [{"masks": (jax.random.uniform(jax.random.fold_in(k_tgt, b),
                                             (T, P)) < 0.3).astype(jnp.float32)}
               for b in range(B)]
    outputs = {"pred_masks": pred_masks}

    # ---- exact (f32) path; tile_p cap 128 exercises the P-reduction grid axis.
    matcher = HungarianMatcher(cost_class=1.0, cost_mask=1.0, cost_dice=1.0,
                               num_points=-1, tile_p=128, use_bf16=False,
                               int8_targets=False)
    indices = matcher(outputs, targets, mask_type="masks")
    assert len(indices) == B
    assert all(len(i) == T and len(j) == T for i, j in indices)

    costs = matcher._cost_matrices(pred_masks, targets, "masks")
    for b in range(B):
        ref = np.asarray(_reference_cost(pred_masks[b], targets[b]["masks"],
                                         1.0, 1.0))
        assert costs[b].shape == (Q, T)
        np.testing.assert_allclose(costs[b], ref, rtol=1e-3, atol=1e-3)

    # ---- fast default path (bf16 storage, int8 targets, bf16 chain on v6e/v7x).
    fast = HungarianMatcher(cost_class=1.0, cost_mask=1.0, cost_dice=1.0,
                            num_points=-1)
    fast_costs = fast._cost_matrices(pred_masks, targets, "masks")
    for b in range(B):
        ref = np.asarray(_reference_cost(pred_masks[b], targets[b]["masks"],
                                         1.0, 1.0))
        assert np.all(np.isfinite(fast_costs[b]))
        np.testing.assert_allclose(fast_costs[b], ref, rtol=0.1, atol=0.1)
    _ = fast(outputs, targets, mask_type="masks")

    # ---- wide-Q scene: exercises the padded-Q lane axis split into parallel
    #      query-tile grid work (q_pad = 384 -> three 128-lane tiles).
    Q2, T2, P2 = 272, 10, 256
    pm2 = [jax.random.normal(jax.random.fold_in(k_pred, 100), (P2, Q2),
                             dtype=jnp.float32)]
    tg2 = [{"masks": (jax.random.uniform(jax.random.fold_in(k_tgt, 100),
                                         (T2, P2)) < 0.3).astype(jnp.float32)}]
    wide_costs = fast._cost_matrices(pm2, tg2, "masks")
    ref2 = np.asarray(_reference_cost(pm2[0], tg2[0]["masks"], 1.0, 1.0))
    assert wide_costs[0].shape == (Q2, T2)
    np.testing.assert_allclose(wide_costs[0], ref2, rtol=0.1, atol=0.1)

    print("KERNEL_OK")
</pallas_src>

<mosaic_0001>
module attributes {stable_mosaic.version = 11 : i64} {
  func.func @_cost_kernel(%arg0: i32, %arg1: i32, %arg2: i32, %arg3: memref<2xf32, #tpu.memory_space<smem>>, %arg4: memref<1x128x128xf32, #tpu.memory_space<vmem>>, %arg5: memref<1x32x128xf32, #tpu.memory_space<vmem>>, %arg6: memref<1x32x128xf32, #tpu.memory_space<vmem>>, %arg7: memref<32x128xf32, #tpu.memory_space<vmem>>, %arg8: memref<32x128xf32, #tpu.memory_space<vmem>>, %arg9: memref<1x128xf32, #tpu.memory_space<vmem>>, %arg10: memref<1x128xf32, #tpu.memory_space<vmem>>, %arg11: memref<32x1xf32, #tpu.memory_space<vmem>>) attributes {dimension_semantics = [#tpu.dimension_semantics<parallel>, #tpu.dimension_semantics<parallel>, #tpu.dimension_semantics<arbitrary>], iteration_bounds = array<i64: 2, 1, 3>, scalar_prefetch = 1 : i64, scratch_operands = 5 : i64, tpu.core_type = #tpu.core_type<tc>, window_params = [{transform_indices = @transform_0, window_bounds = array<i64: 1, 128, 128>}, {transform_indices = @transform_1, window_bounds = array<i64: 1, 32, 128>}, {transform_indices = @transform_2, window_bounds = array<i64: 1, 32, 128>}]} {
    %0 = arith.index_cast %arg0 : i32 to index
    %1 = memref.load %arg3[%0] : memref<2xf32, #tpu.memory_space<smem>>
    %c0_i32 = arith.constant 0 : i32
    %2 = arith.cmpi eq, %arg2, %c0_i32 : i32
    %3 = arith.extui %2 : i1 to i32
    %c0_i32_0 = arith.constant 0 : i32
    %4 = arith.cmpi ne, %3, %c0_i32_0 : i32
    scf.if %4 {
      %cst_37 = arith.constant 0.000000e+00 : f32
      %52 = vector.broadcast %cst_37 : f32 to vector<32x128xf32>
      %c0_38 = arith.constant 0 : index
      %c0_39 = arith.constant 0 : index
      %53 = vector.load %arg7[%c0_38, %c0_39] : memref<32x128xf32, #tpu.memory_space<vmem>>, vector<32x128xf32>
      tpu.vector_store %arg7[%c0_38, %c0_39], %52 {strides = array<i32>} : memref<32x128xf32, #tpu.memory_space<vmem>>, vector<32x128xf32>,
      %cst_40 = arith.constant 0.000000e+00 : f32
      %54 = vector.broadcast %cst_40 : f32 to vector<32x128xf32>
      %c0_41 = arith.constant 0 : index
      %c0_42 = arith.constant 0 : index
      %55 = vector.load %arg8[%c0_41, %c0_42] : memref<32x128xf32, #tpu.memory_space<vmem>>, vector<32x128xf32>
      tpu.vector_store %arg8[%c0_41, %c0_42], %54 {strides = array<i32>} : memref<32x128xf32, #tpu.memory_space<vmem>>, vector<32x128xf32>,
      %cst_43 = arith.constant 0.000000e+00 : f32
      %56 = vector.broadcast %cst_43 : f32 to vector<1x128xf32>
      %c0_44 = arith.constant 0 : index
      %c0_45 = arith.constant 0 : index
      %57 = vector.load %arg9[%c0_44, %c0_45] : memref<1x128xf32, #tpu.memory_space<vmem>>, vector<1x128xf32>
      tpu.vector_store %arg9[%c0_44, %c0_45], %56 {strides = array<i32>} : memref<1x128xf32, #tpu.memory_space<vmem>>, vector<1x128xf32>,
      %cst_46 = arith.constant 0.000000e+00 : f32
      %58 = vector.broadcast %cst_46 : f32 to vector<1x128xf32>
      %c0_47 = arith.constant 0 : index
      %c0_48 = arith.constant 0 : index
      %59 = vector.load %arg10[%c0_47, %c0_48] : memref<1x128xf32, #tpu.memory_space<vmem>>, vector<1x128xf32>
      tpu.vector_store %arg10[%c0_47, %c0_48], %58 {strides = array<i32>} : memref<1x128xf32, #tpu.memory_space<vmem>>, vector<1x128xf32>,
      %cst_49 = arith.constant 0.000000e+00 : f32
      %60 = vector.broadcast %cst_49 : f32 to vector<32x1xf32>
      %c0_50 = arith.constant 0 : index
      %c0_51 = arith.constant 0 : index
      %61 = vector.load %arg11[%c0_50, %c0_51] : memref<32x1xf32, #tpu.memory_space<vmem>>, vector<32x1xf32>
      tpu.vector_store %arg11[%c0_50, %c0_51], %60 {strides = array<i32>} : memref<32x1xf32, #tpu.memory_space<vmem>>, vector<32x1xf32>,
    } else {
    }
    %c0 = arith.constant 0 : index
    %c0_1 = arith.constant 0 : index
    %c0_2 = arith.constant 0 : index
    %5 = vector.load %arg4[%c0, %c0_1, %c0_2] : memref<1x128x128xf32, #tpu.memory_space<vmem>>, vector<1x128x128xf32>
    %6 = vector.shape_cast %5 : vector<1x128x128xf32> to vector<128x128xf32>
    %c0_3 = arith.constant 0 : index
    %c0_4 = arith.constant 0 : index
    %c0_5 = arith.constant 0 : index
    %7 = vector.load %arg5[%c0_3, %c0_4, %c0_5] : memref<1x32x128xf32, #tpu.memory_space<vmem>>, vector<1x32x128xf32>
    %8 = vector.shape_cast %7 : vector<1x32x128xf32> to vector<32x128xf32>
    %9 = math.absf %6 : vector<128x128xf32>
    %cst = arith.constant 0.000000e+00 : f32
    %10 = vector.broadcast %cst : f32 to vector<128x128xf32>
    %11 = arith.subf %10, %9 : vector<128x128xf32>
    %12 = math.exp %11 : vector<128x128xf32>
    %cst_6 = arith.constant 1.000000e+00 : f32
    %13 = vector.broadcast %cst_6 : f32 to vector<128x128xf32>
    %14 = arith.addf %13, %12 : vector<128x128xf32>
    %cst_7 = arith.constant 0.000000e+00 : f32
    %15 = vector.broadcast %cst_7 : f32 to vector<128x128xf32>
    %16 = arith.maximumf %6, %15 : vector<128x128xf32>
    %17 = math.log %14 : vector<128x128xf32>
    %18 = arith.addf %16, %17 : vector<128x128xf32>
    %cst_8 = arith.constant 1.000000e+00 : f32
    %19 = vector.broadcast %cst_8 : f32 to vector<128x128xf32>
    %20 = arith.divf %19, %14 : vector<128x128xf32>
    %cst_9 = arith.constant 0.000000e+00 : f32
    %21 = vector.broadcast %cst_9 : f32 to vector<128x128xf32>
    %22 = arith.cmpf oge, %6, %21 : vector<128x128xf32>
    %cst_10 = arith.constant 1.000000e+00 : f32
    %23 = vector.broadcast %cst_10 : f32 to vector<128x128xf32>
    %24 = arith.subf %23, %20 : vector<128x128xf32>
    %25 = arith.select %22, %20, %24 : vector<128x128xi1>, vector<128x128xf32>
    %c0_11 = arith.constant 0 : index
    %c0_12 = arith.constant 0 : index
    %26 = vector.load %arg7[%c0_11, %c0_12] : memref<32x128xf32, #tpu.memory_space<vmem>>, vector<32x128xf32>
    %cst_13 = arith.constant dense<0.000000e+00> : vector<32x128xf32>
    %27 = tpu.matmul %8, %6, %cst_13 {dimension_numbers = #tpu.dot_dimension_numbers<[1], [0], [0], [1], [0, 0, 1, 1], [], []>, precision = #tpu.contract_precision<fp32>} : vector<32x128xf32>, vector<128x128xf32>, vector<32x128xf32> -> vector<32x128xf32>
    %28 = arith.addf %26, %27 : vector<32x128xf32>
    %c0_14 = arith.constant 0 : index
    %c0_15 = arith.constant 0 : index
    %29 = vector.load %arg7[%c0_14, %c0_15] : memref<32x128xf32, #tpu.memory_space<vmem>>, vector<32x128xf32>
    tpu.vector_store %arg7[%c0_14, %c0_15], %28 {strides = array<i32>} : memref<32x128xf32, #tpu.memory_space<vmem>>, vector<32x128xf32>,
    %c0_16 = arith.constant 0 : index
    %c0_17 = arith.constant 0 : index
    %30 = vector.load %arg8[%c0_16, %c0_17] : memref<32x128xf32, #tpu.memory_space<vmem>>, vector<32x128xf32>
    %cst_18 = arith.constant dense<0.000000e+00> : vector<32x128xf32>
    %31 = tpu.matmul %8, %25, %cst_18 {dimension_numbers = #tpu.dot_dimension_numbers<[1], [0], [0], [1], [0, 0, 1, 1], [], []>, precision = #tpu.contract_precision<fp32>} : vector<32x128xf32>, vector<128x128xf32>, vector<32x128xf32> -> vector<32x128xf32>
    %32 = arith.addf %30, %31 : vector<32x128xf32>
    %c0_19 = arith.constant 0 : index
    %c0_20 = arith.constant 0 : index
    %33 = vector.load %arg8[%c0_19, %c0_20] : memref<32x128xf32, #tpu.memory_space<vmem>>, vector<32x128xf32>
    tpu.vector_store %arg8[%c0_19, %c0_20], %32 {strides = array<i32>} : memref<32x128xf32, #tpu.memory_space<vmem>>, vector<32x128xf32>,
    %c0_21 = arith.constant 0 : index
    %c0_22 = arith.constant 0 : index
    %34 = vector.load %arg9[%c0_21, %c0_22] : memref<1x128xf32, #tpu.memory_space<vmem>>, vector<1x128xf32>
    %cst_23 = arith.constant dense<0.000000e+00> : vector<128xf32>
    %35 = vector.multi_reduction <add>, %18, %cst_23 [0] : vector<128x128xf32> to vector<128xf32>
    %36 = vector.shape_cast %35 : vector<128xf32> to vector<1x128xf32>
    %37 = arith.addf %34, %36 : vector<1x128xf32>
    %c0_24 = arith.constant 0 : index
    %c0_25 = arith.constant 0 : index
    %38 = vector.load %arg9[%c0_24, %c0_25] : memref<1x128xf32, #tpu.memory_space<vmem>>, vector<1x128xf32>
    tpu.vector_store %arg9[%c0_24, %c0_25], %37 {strides = array<i32>} : memref<1x128xf32, #tpu.memory_space<vmem>>, vector<1x128xf32>,
    %c0_26 = arith.constant 0 : index
    %c0_27 = arith.constant 0 : index
    %39 = vector.load %arg10[%c0_26, %c0_27] : memref<1x128xf32, #tpu.memory_space<vmem>>, vector<1x128xf32>
    %cst_28 = arith.constant dense<0.000000e+00> : vector<128xf32>
    %40 = vector.multi_reduction <add>, %25, %cst_28 [0] : vector<128x128xf32> to vector<128xf32>
    %41 = vector.shape_cast %40 : vector<128xf32> to vector<1x128xf32>
    %42 = arith.addf %39, %41 : vector<1x128xf32>
    %c0_29 = arith.constant 0 : index
    %c0_30 = arith.constant 0 : index
    %43 = vector.load %arg10[%c0_29, %c0_30] : memref<1x128xf32, #tpu.memory_space<vmem>>, vector<1x128xf32>
    tpu.vector_store %arg10[%c0_29, %c0_30], %42 {strides = array<i32>} : memref<1x128xf32, #tpu.memory_space<vmem>>, vector<1x128xf32>,
    %c0_31 = arith.constant 0 : index
    %c0_32 = arith.constant 0 : index
    %44 = vector.load %arg11[%c0_31, %c0_32] : memref<32x1xf32, #tpu.memory_space<vmem>>, vector<32x1xf32>
    %cst_33 = arith.constant dense<0.000000e+00> : vector<32xf32>
    %45 = vector.multi_reduction <add>, %8, %cst_33 [1] : vector<32x128xf32> to vector<32xf32>
    %46 = vector.shape_cast %45 : vector<32xf32> to vector<32x1xf32>
    %47 = arith.addf %44, %46 : vector<32x1xf32>
    %c0_34 = arith.constant 0 : index
    %c0_35 = arith.constant 0 : index
    %48 = vector.load %arg11[%c0_34, %c0_35] : memref<32x1xf32, #tpu.memory_space<vmem>>, vector<32x1xf32>
    tpu.vector_store %arg11[%c0_34, %c0_35], %47 {strides = array<i32>} : memref<32x1xf32, #tpu.memory_space<vmem>>, vector<32x1xf32>,
    %c2_i32 = arith.constant 2 : i32
    %49 = arith.cmpi eq, %arg2, %c2_i32 : i32
    %50 = arith.extui %49 : i1 to i32
    %c0_i32_36 = arith.constant 0 : i32
    %51 = arith.cmpi ne, %50, %c0_i32_36 : i32
    scf.if %51 {
      %c0_37 = arith.constant 0 : index
      %c0_38 = arith.constant 0 : index
      %52 = vector.load %arg9[%c0_37, %c0_38] : memref<1x128xf32, #tpu.memory_space<vmem>>, vector<1x128xf32>
      %c0_39 = arith.constant 0 : index
      %c0_40 = arith.constant 0 : index
      %53 = vector.load %arg7[%c0_39, %c0_40] : memref<32x128xf32, #tpu.memory_space<vmem>>, vector<32x128xf32>
      %54 = vector.broadcast %52 : vector<1x128xf32> to vector<32x128xf32>
      %55 = arith.subf %54, %53 : vector<32x128xf32>
      %56 = vector.broadcast %1 : f32 to vector<32x128xf32>
      %57 = arith.mulf %55, %56 : vector<32x128xf32>
      %c0_41 = arith.constant 0 : index
      %c0_42 = arith.constant 0 : index
      %58 = vector.load %arg8[%c0_41, %c0_42] : memref<32x128xf32, #tpu.memory_space<vmem>>, vector<32x128xf32>
      %cst_43 = arith.constant 2.000000e+00 : f32
      %59 = vector.broadcast %cst_43 : f32 to vector<32x128xf32>
      %60 = arith.mulf %59, %58 : vector<32x128xf32>
      %cst_44 = arith.constant 1.000000e+00 : f32
      %61 = vector.broadcast %cst_44 : f32 to vector<32x128xf32>
      %62 = arith.addf %60, %61 : vector<32x128xf32>
      %c0_45 = arith.constant 0 : index
      %c0_46 = arith.constant 0 : index
      %63 = vector.load %arg10[%c0_45, %c0_46] : memref<1x128xf32, #tpu.memory_space<vmem>>, vector<1x128xf32>
      %c0_47 = arith.constant 0 : index
      %c0_48 = arith.constant 0 : index
      %64 = vector.load %arg11[%c0_47, %c0_48] : memref<32x1xf32, #tpu.memory_space<vmem>>, vector<32x1xf32>
      %65 = vector.broadcast %63 : vector<1x128xf32> to vector<32x128xf32>
      %66 = vector.broadcast %64 : vector<32x1xf32> to vector<32x128xf32>
      %67 = arith.addf %65, %66 : vector<32x128xf32>
      %cst_49 = arith.constant 1.000000e+00 : f32
      %68 = vector.broadcast %cst_49 : f32 to vector<32x128xf32>
      %69 = arith.addf %67, %68 : vector<32x128xf32>
      %70 = arith.divf %62, %69 : vector<32x128xf32>
      %cst_50 = arith.constant 1.000000e+00 : f32
      %71 = vector.broadcast %cst_50 : f32 to vector<32x128xf32>
      %72 = arith.subf %71, %70 : vector<32x128xf32>
      %cst_51 = arith.constant 1.000000e+00 : f32
      %73 = vector.broadcast %cst_51 : f32 to vector<32x128xf32>
      %74 = arith.mulf %73, %57 : vector<32x128xf32>
      %cst_52 = arith.constant 1.000000e+00 : f32
      %75 = vector.broadcast %cst_52 : f32 to vector<32x128xf32>
      %76 = arith.mulf %75, %72 : vector<32x128xf32>
      %77 = arith.addf %74, %76 : vector<32x128xf32>
      %c0_53 = arith.constant 0 : index
      %c0_54 = arith.constant 0 : index
      %c0_55 = arith.constant 0 : index
      %78 = vector.load %arg6[%c0_53, %c0_54, %c0_55] : memref<1x32x128xf32, #tpu.memory_space<vmem>>, vector<1x32x128xf32>
      %79 = vector.shape_cast %78 : vector<1x32x128xf32> to vector<32x128xf32>
      %80 = vector.shape_cast %77 : vector<32x128xf32> to vector<1x32x128xf32>
      tpu.vector_store %arg6[%c0_53, %c0_54, %c0_55], %80 {strides = array<i32>} : memref<1x32x128xf32, #tpu.memory_space<vmem>>, vector<1x32x128xf32>,
    } else {
    }
    return
  }
  func.func @transform_0(%arg0: i32, %arg1: i32, %arg2: i32, %arg3: memref<2xf32, #tpu.memory_space<smem>>) -> (i32, i32, i32) {
    %c0_i32 = arith.constant 0 : i32
    return %arg0, %arg2, %arg1 : i32, i32, i32
  }
  func.func @transform_1(%arg0: i32, %arg1: i32, %arg2: i32, %arg3: memref<2xf32, #tpu.memory_space<smem>>) -> (i32, i32, i32) {
    %c0_i32 = arith.constant 0 : i32
    %c0_i32_0 = arith.constant 0 : i32
    return %arg0, %c0_i32, %arg2 : i32, i32, i32
  }
  func.func @transform_2(%arg0: i32, %arg1: i32, %arg2: i32, %arg3: memref<2xf32, #tpu.memory_space<smem>>) -> (i32, i32, i32) {
    %c0_i32 = arith.constant 0 : i32
    %c0_i32_0 = arith.constant 0 : i32
    return %arg0, %c0_i32, %arg1 : i32, i32, i32
  }
}

</mosaic_0001>

<llo_original>
// kernel: tpu_custom_call.1
$region0: #{tpu_custom_call.1}
  #allocation0 [shape = 'u32[]', space=smem, size = 0x4, offset = 0x4, fixed_abs, tag = 'smem constant byte address 0x4 - core index']
  #allocation1 [shape = 'u32[144,128]{1,0:T(1,128)}', space=vmem, size = 0x12000, scoped, tag = 'internal scratch']
  #allocation2 [shape = 'f32[32,128]{1,0:T(8,128)}', space=vmem, size = 0x4000, scoped, tag = 'scratch operand']
  #allocation3 [shape = 'f32[32,128]{1,0:T(8,128)}', space=vmem, size = 0x4000, scoped, tag = 'scratch operand']
  #allocation4 [shape = 'f32[1,128]{1,0:T(1,128)}', space=vmem, size = 0x200, scoped, tag = 'scratch operand']
  #allocation5 [shape = 'f32[1,128]{1,0:T(1,128)}', space=vmem, size = 0x200, scoped, tag = 'scratch operand']
  #allocation6 [shape = 'f32[32,1]{1,0:T(8,128)}', space=vmem, size = 0x4000, scoped, tag = 'scratch operand']
  #allocation7 [shape = 's32[1]{0}', space=sflag, size = 0x4, scoped, tag = 'scoped memory for tpu_custom_call.1']
  #allocation8 [shape = 'u8[512]{0}', space=smem, size = 0x200, scoped, tag = 'prefetched SMEM operand 0']
  %s0 = inlined_call_operand.hbm [shape: f32[2], index: 0, kind: input, shape index: {}]
  %s1 = inlined_call_operand.hbm [shape: f32[2,384,128], index: 1, kind: input, shape index: {}]
  %s2 = inlined_call_operand.hbm [shape: f32[2,32,384], index: 2, kind: input, shape index: {}]
  %s3 = inlined_call_operand.hbm [shape: f32[2,32,128], index: 3, kind: output, shape index: {}]
  %s4 = sld [smem:[#allocation0]]
  $region57: #{tpu_custom_call.1} parent=0
    _
  %s6 = ssub.s32 1, %s4
  %s7 = scalar_select 0, %s6, %s4
  %9 = dma.hbm_to_smem %s0, 16, [#allocation8], [#allocation7]
  %10 = dma.done [#allocation7], 16
  %11 = sfence
  $region1: #{tpu_custom_call.1} parent=0
    #allocation9 [shape = 'u8[131072]{0}', space=vmem, size = 0x20000, scoped, tag = 'input window, operand 1']
    #allocation10 [shape = 's32[2]{0}', space=sflag, size = 0x8, scoped, tag = 'scoped memory for tpu_custom_call.1']
    #allocation11 [shape = 's32[2]{0}', space=sflag, size = 0x8, scoped, tag = 'scoped memory for tpu_custom_call.1']
    #allocation12 [shape = 'u8[32768]{0}', space=vmem, size = 0x8000, scoped, tag = 'input window, operand 2']
    #allocation13 [shape = 's32[2]{0}', space=sflag, size = 0x8, scoped, tag = 'scoped memory for tpu_custom_call.1']
    #allocation14 [shape = 'u8[32768]{0}', space=vmem, size = 0x8000, scoped, tag = 'output window, operand 0']
    %12 = vsyncpa [#allocation10], 0
    %s13 = scalar_lea.sflag [#allocation10], 1
    %14 = vsyncpa %s13, 0
    %15 = vsyncpa [#allocation13], 0
    %s16 = scalar_lea.sflag [#allocation13], 1
    %17 = vsyncpa %s16, 0
    %18 = vsyncpa [#allocation11], 0
    %s19 = scalar_lea.sflag [#allocation11], 1
    %20 = vsyncpa %s19, 0
    loop: start=0, step=1, limit=8
    $region2: #{tpu_custom_call.1} parent=1 // loop_pre_header
      _
    $region3: #{tpu_custom_call.1} parent=1 // loop_header
      %s22 = sphi 0, %s26
      %p23 = scmp.ge.s32.totalorder %s22, 8
      %s29 = sphi 0, %s48
      %s30 = sphi 0, %s44
      %s31 = sphi 0, %s40
      %s32 = sphi 0, %s29
      %s33 = sphi 0, %s30
      %s34 = sphi 0, %s31
      %s35 = sphi 0, %s32
      %s36 = sphi 0, %s33
      %s37 = sphi 0, %s34
      %s55 = sphi 0, %s57
      %s58 = sphi 0, %s55
      %s59 = sphi 0, %s58
      %s75 = sphi 0, %s59
      %s83 = sphi 0, %s85
      %s86 = sphi 0, %s83
      %s87 = sphi 0, %s86
      %s103 = sphi 0, %s87
      %s111 = sphi 0, %s113
      %s114 = sphi 0, %s111
      %s115 = sphi 0, %s114
      %s131 = sphi 0, %s115
    $region4: #{tpu_custom_call.1} parent=1 // loop_header_branch
      %25 = sbr.rel (%p23) target = $region8
    $region5: #{tpu_custom_call.1} parent=1 // loop_body
      %s27 = ssub.s32 %s22, 1
      %s28 = ssub.s32 %s22, 2
      %s38 = sadd.s32 1, %s31
      %p39 = scmp.ge.s32.totalorder %s38, 3
      %s40 = scalar_select %p39, 0, %s38
      %s41 = sadd.s32 1, %s30
      %s42 = scalar_select %p39, %s41, %s30
      %p43 = scmp.ge.s32.totalorder %s42, 1
      %s44 = scalar_select %p43, 0, %s42
      %s45 = sadd.s32 1, %s29
      %s46 = scalar_select %p43, %s45, %s29
      %p47 = scmp.ge.s32.totalorder %s46, 2
      %s48 = scalar_select %p47, 0, %s46
      %s49 = ssub.s32 %s29, %s48
      %s50 = ssub.s32 %s31, %s40
      %s51 = sor.u32 %s49, %s50
      %s52 = ssub.s32 %s30, %s44
      %s53 = sor.u32 %s51, %s52
      %p54 = scmp.eq.s32.totalorder %s53, 0
      %s56 = sadd.s32 %s55, 1
      %s57 = scalar_select %p54, %s55, %s56
      %p60 = pneg %p54
      %p61 = scmp.eq.s32.totalorder %s22, 5
      %p62 = por %p60, %p61
      %p63 = scmp.ne.s32.totalorder %s55, %s58
      %p64 = scmp.eq.s32.totalorder %s22, 0
      %p65 = por %p63, %p64
      %p66 = scmp.ne.s32.totalorder %s55, %s58
      %p67 = scmp.eq.s32.totalorder %s27, 5
      %p68 = por %p66, %p67
      %p69 = scmp.ne.s32.totalorder %s58, %s59
      %p70 = scmp.eq.s32.totalorder %s27, 0
      %p71 = por %p69, %p70
      %p72 = scmp.ne.s32.totalorder %s58, %s59
      %p73 = scmp.eq.s32.totalorder %s28, 5
      %p74 = por %p72, %p73
      %p76 = scmp.ne.s32.totalorder %s59, %s75
      %p77 = scmp.eq.s32.totalorder %s28, 0
      %p78 = por %p76, %p77
      %s79 = ssub.s32 %s29, %s48
      %s80 = ssub.s32 %s31, %s40
      %s81 = sor.u32 %s79, %s80
      %p82 = scmp.eq.s32.totalorder %s81, 0
      %s84 = sadd.s32 %s83, 1
      %s85 = scalar_select %p82, %s83, %s84
      %p88 = pneg %p82
      %p89 = scmp.eq.s32.totalorder %s22, 5
      %p90 = por %p88, %p89
      %p91 = scmp.ne.s32.totalorder %s83, %s86
      %p92 = scmp.eq.s32.totalorder %s22, 0
      %p93 = por %p91, %p92
      %p94 = scmp.ne.s32.totalorder %s83, %s86
      %p95 = scmp.eq.s32.totalorder %s27, 5
      %p96 = por %p94, %p95
      %p97 = scmp.ne.s32.totalorder %s86, %s87
      %p98 = scmp.eq.s32.totalorder %s27, 0
      %p99 = por %p97, %p98
      %p100 = scmp.ne.s32.totalorder %s86, %s87
      %p101 = scmp.eq.s32.totalorder %s28, 5
      %p102 = por %p100, %p101
      %p104 = scmp.ne.s32.totalorder %s87, %s103
      %p105 = scmp.eq.s32.totalorder %s28, 0
      %p106 = por %p104, %p105
      %s107 = ssub.s32 %s29, %s48
      %s108 = ssub.s32 %s30, %s44
      %s109 = sor.u32 %s107, %s108
      %p110 = scmp.eq.s32.totalorder %s109, 0
      %s112 = sadd.s32 %s111, 1
      %s113 = scalar_select %p110, %s111, %s112
      %p116 = pneg %p110
      %p117 = scmp.eq.s32.totalorder %s22, 5
      %p118 = por %p116, %p117
      %p119 = scmp.ne.s32.totalorder %s111, %s114
      %p120 = scmp.eq.s32.totalorder %s22, 0
      %p121 = por %p119, %p120
      %p122 = scmp.ne.s32.totalorder %s111, %s114
      %p123 = scmp.eq.s32.totalorder %s27, 5
      %p124 = por %p122, %p123
      %p125 = scmp.ne.s32.totalorder %s114, %s115
      %p126 = scmp.eq.s32.totalorder %s27, 0
      %p127 = por %p125, %p126
      %p128 = scmp.ne.s32.totalorder %s114, %s115
      %p129 = scmp.eq.s32.totalorder %s28, 5
      %p130 = por %p128, %p129
      %p132 = scmp.ne.s32.totalorder %s115, %s131
      %p133 = scmp.eq.s32.totalorder %s28, 0
      %p134 = por %p132, %p133
      %p135 = scmp.le.s32.totalorder 1, %s22
      %p136 = scmp.lt.s32.totalorder %s22, 7
      %p137 = pnand %p135, %p136
      %p138 = pneg %p137
      // Predicated region
      $region9: #{tpu_custom_call.1} parent=5 // pred_check
        _
      $region10: #{tpu_custom_call.1} parent=5 // pred_check_branch
        %140 = sbr.rel (%p137) target = $region12
      $region11: #{tpu_custom_call.1} parent=5 // pred_region
        %s141 = ssub.s32 %s22, 1
      $region12: #{tpu_custom_call.1} parent=5 // pred_fallthru
        _
      %p142 = scmp.lt.s32.totalorder %s22, 6
      // Predicated region
      $region13: #{tpu_custom_call.1} parent=5 // pred_check
        %p143 = pneg %p142
      $region14: #{tpu_custom_call.1} parent=5 // pred_check_branch
        %145 = sbr.rel (%p143) target = $region16
      $region15: #{tpu_custom_call.1} parent=5 // pred_region
        // Predicated region
        $region17: #{tpu_custom_call.1} parent=15 // pred_check
          %p146 = pneg %p65
        $region18: #{tpu_custom_call.1} parent=15 // pred_check_branch
          %148 = sbr.rel (%p146) target = $region20
        $region19: #{tpu_custom_call.1} parent=15 // pred_region
          %s149 = sand.u32 %s55, 1
          %s150 = scalar_lea.sflag [#allocation10], %s149
          %s151 = sand.u32 %s55, 1
          %s152 = smul.addr %s151, 128
          %s153 = scalar_lea.vmem [#allocation9], %s152
          %s154 = smul.u32 16, %s31
          %s156 = ssub.s32 2048, 2048
          %157 = vsyncadd %s150, %s156
          %s158 = sadd.s32 %s30, %s154
          %s159 = smul.addr %s29, 48
          %s160 = sadd.s32 %s158, %s159
          %s161 = smul.addr %s160, 128
          %s162 = scalar_lea.hbm %s1, %s161
          %s163 = sshll.u32 %s153, 4
          %s164 = int_to_ptr.vmem [resolvable:$true] %s163
          %169 = dma.hbm_to_vmem [thread:$0]  %s162, 2048, %s164, %s150, 128, 128, 8
        $region20: #{tpu_custom_call.1} parent=15 // pred_fallthru
          _
        // Predicated region
        $region21: #{tpu_custom_call.1} parent=15 // pred_check
          %p170 = pneg %p93
        $region22: #{tpu_custom_call.1} parent=15 // pred_check_branch
          %172 = sbr.rel (%p170) target = $region24
        $region23: #{tpu_custom_call.1} parent=15 // pred_region
          %s173 = sand.u32 %s83, 1
          %s174 = scalar_lea.sflag [#allocation13], %s173
          %s175 = sand.u32 %s83, 1
          %s176 = smul.addr %s175, 32
          %s177 = scalar_lea.vmem [#allocation12], %s176
          %s179 = ssub.s32 512, 512
          %180 = vsyncadd %s174, %s179
          %s181 = smul.addr %s29, 12
          %s182 = sadd.s32 %s31, %s181
          %s183 = smul.addr %s182, 128
          %s184 = scalar_lea.hbm %s2, %s183
          %s185 = sshll.u32 %s177, 4
          %s186 = int_to_ptr.vmem [resolvable:$true] %s185
          %191 = dma.hbm_to_vmem [thread:$0]  %s184, 512, %s186, %s174, 384, 128, 8
        $region24: #{tpu_custom_call.1} parent=15 // pred_fallthru
          _
      $region16: #{tpu_custom_call.1} parent=5 // pred_fallthru
        _
      %p192 = scmp.le.s32.totalorder 1, %s22
      %p193 = scmp.lt.s32.totalorder %s22, 7
      %p194 = pnand %p192, %p193
      %p195 = pneg %p194
      // Predicated region
      $region25: #{tpu_custom_call.1} parent=5 // pred_check
        _
      $region26: #{tpu_custom_call.1} parent=5 // pred_check_branch
        %197 = sbr.rel (%p194) target = $region28
      $region27: #{tpu_custom_call.1} parent=5 // pred_region
        %s198 = ssub.s32 %s22, 1
        %s199 = sand.u32 %s58, 1
        %s200 = scalar_lea.sflag [#allocation10], %s199
        %s201 = sand.u32 %s58, 1
        %s202 = smul.addr %s201, 128
        %s203 = scalar_lea.vmem [#allocation9], %s202
        // Predicated region
        $region29: #{tpu_custom_call.1} parent=27 // pred_check
          %p204 = pneg %p71
        $region30: #{tpu_custom_call.1} parent=27 // pred_check_branch
          %206 = sbr.rel (%p204) target = $region32
        $region31: #{tpu_custom_call.1} parent=27 // pred_region
          %207 = dma.done %s200, 2048
        $region32: #{tpu_custom_call.1} parent=27 // pred_fallthru
          _
        %s208 = sand.u32 %s86, 1
        %s209 = scalar_lea.sflag [#allocation13], %s208
        %s210 = sand.u32 %s86, 1
        %s211 = smul.addr %s210, 32
        %s212 = scalar_lea.vmem [#allocation12], %s211
        // Predicated region
        $region33: #{tpu_custom_call.1} parent=27 // pred_check
          %p213 = pneg %p99
        $region34: #{tpu_custom_call.1} parent=27 // pred_check_branch
          %215 = sbr.rel (%p213) target = $region36
        $region35: #{tpu_custom_call.1} parent=27 // pred_region
          %216 = dma.done %s209, 512
        $region36: #{tpu_custom_call.1} parent=27 // pred_fallthru
          _
        %s217 = sand.u32 %s58, 1
        %s218 = scalar_lea.sflag [#allocation10], %s217
        %s219 = sand.u32 %s58, 1
        %s220 = smul.addr %s219, 128
        %s221 = scalar_lea.vmem [#allocation9], %s220
        %p222 = pneg %p71
        %p223 = pneg %p68
        %s224 = sand.u32 %s86, 1
        %s225 = scalar_lea.sflag [#allocation13], %s224
        %s226 = sand.u32 %s86, 1
        %s227 = smul.addr %s226, 32
        %s228 = scalar_lea.vmem [#allocation12], %s227
        %p229 = pneg %p99
        %p230 = pneg %p96
        %p231 = pneg %p127
        %p232 = pneg %p124
        %s233 = sand.u32 %s114, 1
        %s234 = scalar_lea.sflag [#allocation11], %s233
        %s235 = sand.u32 %s114, 1
        %s236 = smul.addr %s235, 32
        %s237 = scalar_lea.vmem [#allocation14], %s236
        %s238 = smul.u32 16, %s34
        %s239 = sld [smem:[#allocation8 + %s32]]
        %p240 = scmp.eq.s32.totalorder %s34, 0
        // Predicated region
        $region37: #{tpu_custom_call.1} parent=27 // pred_check
          %p241 = pneg %p240
        $region38: #{tpu_custom_call.1} parent=27 // pred_check_branch
          %243 = sbr.rel (%p241) target = $region40
        $region39: #{tpu_custom_call.1} parent=27 // pred_region
          %244 = vst [vmem:[#allocation2] sm:$0xff] 0.0
          %245 = vst [vmem:[#allocation2 + $0x8] sm:$0xff] 0.0
          %246 = vst [vmem:[#allocation2 + $0x10] sm:$0xff] 0.0
          %247 = vst [vmem:[#allocation2 + $0x18] sm:$0xff] 0.0
          %248 = vst [vmem:[#allocation3] sm:$0xff] 0.0
          %249 = vst [vmem:[#allocation3 + $0x8] sm:$0xff] 0.0
          %250 = vst [vmem:[#allocation3 + $0x10] sm:$0xff] 0.0
          %251 = vst [vmem:[#allocation3 + $0x18] sm:$0xff] 0.0
          %252 = vst [vmem:[#allocation4] sm:$0x1] 0.0
          %253 = vst [vmem:[#allocation5] sm:$0x1] 0.0
          %vm254 = vcmask 7168
          %255 = vst.msk [vmem:[#allocation6] sm:$0xff] %vm254, 0.0
          %256 = vst.msk [vmem:[#allocation6 + $0x8] sm:$0xff] %vm254, 0.0
          %257 = vst.msk [vmem:[#allocation6 + $0x10] sm:$0xff] %vm254, 0.0
          %258 = vst.msk [vmem:[#allocation6 + $0x18] sm:$0xff] %vm254, 0.0
        $region40: #{tpu_custom_call.1} parent=27 // pred_fallthru
          _
        %v259 = vld [vmem:[%s203] sm:$0xff]
        %v260 = vld [vmem:[%s203 + $0x8] sm:$0xff]
        %v261 = vld [vmem:[%s203 + $0x10] sm:$0xff]
        %v262 = vld [vmem:[%s203 + $0x18] sm:$0xff]
        %v263 = vld [vmem:[%s203 + $0x20] sm:$0xff]
        %v264 = vld [vmem:[%s203 + $0x28] sm:$0xff]
        %v265 = vld [vmem:[%s203 + $0x30] sm:$0xff]
        %v266 = vld [vmem:[%s203 + $0x38] sm:$0xff]
        %v267 = vld [vmem:[%s203 + $0x40] sm:$0xff]
        %v268 = vld [vmem:[%s203 + $0x48] sm:$0xff]
        %v269 = vld [vmem:[%s203 + $0x50] sm:$0xff]
        %v270 = vld [vmem:[%s203 + $0x58] sm:$0xff]
        %v271 = vld [vmem:[%s203 + $0x60] sm:$0xff]
        %v272 = vld [vmem:[%s203 + $0x68] sm:$0xff]
        %v273 = vld [vmem:[%s203 + $0x70] sm:$0xff]
        %v274 = vld [vmem:[%s203 + $0x78] sm:$0xff]
        %v275 = vld [vmem:[%s212] sm:$0xff]
        %v276 = vld [vmem:[%s212 + $0x8] sm:$0xff]
        %v277 = vld [vmem:[%s212 + $0x10] sm:$0xff]
        %v278 = vld [vmem:[%s212 + $0x18] sm:$0xff]
        %v279 = vand.u32 2147483647, %v259
        %v280 = vand.u32 2147483647, %v260
        %v281 = vand.u32 2147483647, %v261
        %v282 = vand.u32 2147483647, %v262
        %v283 = vand.u32 2147483647, %v263
        %v284 = vand.u32 2147483647, %v264
        %v285 = vand.u32 2147483647, %v265
        %v286 = vand.u32 2147483647, %v266
        %v287 = vand.u32 2147483647, %v267
        %v288 = vand.u32 2147483647, %v268
        %v289 = vand.u32 2147483647, %v269
        %v290 = vand.u32 2147483647, %v270
        %v291 = vand.u32 2147483647, %v271
        %v292 = vand.u32 2147483647, %v272
        %v293 = vand.u32 2147483647, %v273
        %v294 = vand.u32 2147483647, %v274
        %v295 = vsub.f32 0.0, %v279
        %v296 = vsub.f32 0.0, %v280
        %v297 = vsub.f32 0.0, %v281
        %v298 = vsub.f32 0.0, %v282
        %v299 = vsub.f32 0.0, %v283
        %v300 = vsub.f32 0.0, %v284
        %v301 = vsub.f32 0.0, %v285
        %v302 = vsub.f32 0.0, %v286
        %v303 = vsub.f32 0.0, %v287
        %v304 = vsub.f32 0.0, %v288
        %v305 = vsub.f32 0.0, %v289
        %v306 = vsub.f32 0.0, %v290
        %v307 = vsub.f32 0.0, %v291
        %v308 = vsub.f32 0.0, %v292
        %v309 = vsub.f32 0.0, %v293
        %v310 = vsub.f32 0.0, %v294
        %v311 = vmul.f32 %v295, 1.442695
        %v312 = vpow.pop %v311
        %v313 = vmul.f32 %v296, 1.442695
        %v314 = vpow.pop %v313
        %v315 = vmul.f32 %v297, 1.442695
        %v316 = vpow.pop %v315
        %v317 = vmul.f32 %v298, 1.442695
        %v318 = vpow.pop %v317
        %v319 = vmul.f32 %v299, 1.442695
        %v320 = vpow.pop %v319
        %v321 = vmul.f32 %v300, 1.442695
        %v322 = vpow.pop %v321
        %v323 = vmul.f32 %v301, 1.442695
        %v324 = vpow.pop %v323
        %v325 = vmul.f32 %v302, 1.442695
        %v326 = vpow.pop %v325
        %v327 = vmul.f32 %v303, 1.442695
        %v328 = vpow.pop %v327
        %v329 = vmul.f32 %v304, 1.442695
        %v330 = vpow.pop %v329
        %v331 = vmul.f32 %v305, 1.442695
        %v332 = vpow.pop %v331
        %v333 = vmul.f32 %v306, 1.442695
        %v334 = vpow.pop %v333
        %v335 = vmul.f32 %v307, 1.442695
        %v336 = vpow.pop %v335
        %v337 = vmul.f32 %v308, 1.442695
        %v338 = vpow.pop %v337
        %v339 = vmul.f32 %v309, 1.442695
        %v340 = vpow.pop %v339
        %v341 = vmul.f32 %v310, 1.442695
        %v342 = vpow.pop %v341
        %v343 = vadd.f32 %v312, 1.0
        %v344 = vadd.f32 %v314, 1.0
        %v345 = vadd.f32 %v316, 1.0
        %v346 = vadd.f32 %v318, 1.0
        %v347 = vadd.f32 %v320, 1.0
        %v348 = vadd.f32 %v322, 1.0
        %v349 = vadd.f32 %v324, 1.0
        %v350 = vadd.f32 %v326, 1.0
        %v351 = vadd.f32 %v328, 1.0
        %v352 = vadd.f32 %v330, 1.0
        %v353 = vadd.f32 %v332, 1.0
        %v354 = vadd.f32 %v334, 1.0
        %v355 = vadd.f32 %v336, 1.0
        %v356 = vadd.f32 %v338, 1.0
        %v357 = vadd.f32 %v340, 1.0
        %v358 = vadd.f32 %v342, 1.0
        %v359 = vmax.f32 %v259, 0.0
        %v360 = vmax.f32 %v260, 0.0
        %v361 = vmax.f32 %v261, 0.0
        %v362 = vmax.f32 %v262, 0.0
        %v363 = vmax.f32 %v263, 0.0
        %v364 = vmax.f32 %v264, 0.0
        %v365 = vmax.f32 %v265, 0.0
        %v366 = vmax.f32 %v266, 0.0
        %v367 = vmax.f32 %v267, 0.0
        %v368 = vmax.f32 %v268, 0.0
        %v369 = vmax.f32 %v269, 0.0
        %v370 = vmax.f32 %v270, 0.0
        %v371 = vmax.f32 %v271, 0.0
        %v372 = vmax.f32 %v272, 0.0
        %v373 = vmax.f32 %v273, 0.0
        %v374 = vmax.f32 %v274, 0.0
        %v375 = vlog2.pop %v343
        %v376 = vmul.f32 %v375, 0.6931472
        %v377 = vlog2.pop %v344
        %v378 = vmul.f32 %v377, 0.6931472
        %v379 = vlog2.pop %v345
        %v380 = vmul.f32 %v379, 0.6931472
        %v381 = vlog2.pop %v346
        %v382 = vmul.f32 %v381, 0.6931472
        %v383 = vlog2.pop %v347
        %v384 = vmul.f32 %v383, 0.6931472
        %v385 = vlog2.pop %v348
        %v386 = vmul.f32 %v385, 0.6931472
        %v387 = vlog2.pop %v349
        %v388 = vmul.f32 %v387, 0.6931472
        %v389 = vlog2.pop %v350
        %v390 = vmul.f32 %v389, 0.6931472
        %v391 = vlog2.pop %v351
        %v392 = vmul.f32 %v391, 0.6931472
        %v393 = vlog2.pop %v352
        %v394 = vmul.f32 %v393, 0.6931472
        %v395 = vlog2.pop %v353
        %v396 = vmul.f32 %v395, 0.6931472
        %v397 = vlog2.pop %v354
        %v398 = vmul.f32 %v397, 0.6931472
        %v399 = vlog2.pop %v355
        %v400 = vmul.f32 %v399, 0.6931472
        %v401 = vlog2.pop %v356
        %v402 = vmul.f32 %v401, 0.6931472
        %v403 = vlog2.pop %v357
        %v404 = vmul.f32 %v403, 0.6931472
        %v405 = vlog2.pop %v358
        %v406 = vmul.f32 %v405, 0.6931472
        %v407 = vadd.f32 %v359, %v376
        %v408 = vadd.f32 %v360, %v378
        %v409 = vadd.f32 %v361, %v380
        %v410 = vadd.f32 %v362, %v382
        %v411 = vadd.f32 %v363, %v384
        %v412 = vadd.f32 %v364, %v386
        %v413 = vadd.f32 %v365, %v388
        %v414 = vadd.f32 %v366, %v390
        %v415 = vadd.f32 %v367, %v392
        %v416 = vadd.f32 %v368, %v394
        %v417 = vadd.f32 %v369, %v396
        %v418 = vadd.f32 %v370, %v398
        %v419 = vadd.f32 %v371, %v400
        %v420 = vadd.f32 %v372, %v402
        %v421 = vadd.f32 %v373, %v404
        %v422 = vadd.f32 %v374, %v406
        %v423 = vrcp.pop %v343
        %v424 = vmul.f32 1.0, %v423
        %v425 = vrcp.pop %v344
        %v426 = vmul.f32 1.0, %v425
        %v427 = vrcp.pop %v345
        %v428 = vmul.f32 1.0, %v427
        %v429 = vrcp.pop %v346
        %v430 = vmul.f32 1.0, %v429
        %v431 = vrcp.pop %v347
        %v432 = vmul.f32 1.0, %v431
        %v433 = vrcp.pop %v348
        %v434 = vmul.f32 1.0, %v433
        %v435 = vrcp.pop %v349
        %v436 = vmul.f32 1.0, %v435
        %v437 = vrcp.pop %v350
        %v438 = vmul.f32 1.0, %v437
        %v439 = vrcp.pop %v351
        %v440 = vmul.f32 1.0, %v439
        %v441 = vrcp.pop %v352
        %v442 = vmul.f32 1.0, %v441
        %v443 = vrcp.pop %v353
        %v444 = vmul.f32 1.0, %v443
        %v445 = vrcp.pop %v354
        %v446 = vmul.f32 1.0, %v445
        %v447 = vrcp.pop %v355
        %v448 = vmul.f32 1.0, %v447
        %v449 = vrcp.pop %v356
        %v450 = vmul.f32 1.0, %v449
        %v451 = vrcp.pop %v357
        %v452 = vmul.f32 1.0, %v451
        %v453 = vrcp.pop %v358
        %v454 = vmul.f32 1.0, %v453
        %vm455 = vcmp.ge.f32.partialorder %v259, 0.0
        %vm456 = vcmp.ge.f32.partialorder %v260, 0.0
        %vm457 = vcmp.ge.f32.partialorder %v261, 0.0
        %vm458 = vcmp.ge.f32.partialorder %v262, 0.0
        %vm459 = vcmp.ge.f32.partialorder %v263, 0.0
        %vm460 = vcmp.ge.f32.partialorder %v264, 0.0
        %vm461 = vcmp.ge.f32.partialorder %v265, 0.0
        %vm462 = vcmp.ge.f32.partialorder %v266, 0.0
        %vm463 = vcmp.ge.f32.partialorder %v267, 0.0
        %vm464 = vcmp.ge.f32.partialorder %v268, 0.0
        %vm465 = vcmp.ge.f32.partialorder %v269, 0.0
        %vm466 = vcmp.ge.f32.partialorder %v270, 0.0
        %vm467 = vcmp.ge.f32.partialorder %v271, 0.0
        %vm468 = vcmp.ge.f32.partialorder %v272, 0.0
        %vm469 = vcmp.ge.f32.partialorder %v273, 0.0
        %vm470 = vcmp.ge.f32.partialorder %v274, 0.0
        %v471 = vsub.f32 1.0, %v424
        %v472 = vsub.f32 1.0, %v426
        %v473 = vsub.f32 1.0, %v428
        %v474 = vsub.f32 1.0, %v430
        %v475 = vsub.f32 1.0, %v432
        %v476 = vsub.f32 1.0, %v434
        %v477 = vsub.f32 1.0, %v436
        %v478 = vsub.f32 1.0, %v438
        %v479 = vsub.f32 1.0, %v440
        %v480 = vsub.f32 1.0, %v442
        %v481 = vsub.f32 1.0, %v444
        %v482 = vsub.f32 1.0, %v446
        %v483 = vsub.f32 1.0, %v448
        %v484 = vsub.f32 1.0, %v450
        %v485 = vsub.f32 1.0, %v452
        %v486 = vsub.f32 1.0, %v454
        %v487 = vsel %vm455, %v424, %v471
        %v488 = vsel %vm456, %v426, %v472
        %v489 = vsel %vm457, %v428, %v473
        %v490 = vsel %vm458, %v430, %v474
        %v491 = vsel %vm459, %v432, %v475
        %v492 = vsel %vm460, %v434, %v476
        %v493 = vsel %vm461, %v436, %v477
        %v494 = vsel %vm462, %v438, %v478
        %v495 = vsel %vm463, %v440, %v479
        %v496 = vsel %vm464, %v442, %v480
        %v497 = vsel %vm465, %v444, %v481
        %v498 = vsel %vm466, %v446, %v482
        %v499 = vsel %vm467, %v448, %v483
        %v500 = vsel %vm468, %v450, %v484
        %v501 = vsel %vm469, %v452, %v485
        %v502 = vsel %vm470, %v454, %v486
        %v503 = vld [vmem:[#allocation2] sm:$0xff]
        %v504 = vld [vmem:[#allocation2 + $0x8] sm:$0xff]
        %v505 = vld [vmem:[#allocation2 + $0x10] sm:$0xff]
        %v506 = vld [vmem:[#allocation2 + $0x18] sm:$0xff]
        %507 = vmatprep.subr.mxu0 0.0
        %v508 = vand.u32 %v274, 4294901760
        %509 = vmatpush1.msra.mxu0 %v508
        %510 = vmatprep.subr.mxu0 0.0
        %v511 = vand.u32 %v273, 4294901760
        %512 = vmatpush1.msra.mxu0 %v511
        %513 = vmatprep.subr.mxu0 0.0
        %v514 = vand.u32 %v272, 4294901760
        %515 = vmatpush1.msra.mxu0 %v514
        %516 = vmatprep.subr.mxu0 0.0
        %v517 = vand.u32 %v271, 4294901760
        %518 = vmatpush1.msra.mxu0 %v517
        %519 = vmatprep.subr.mxu0 0.0
        %v520 = vand.u32 %v270, 4294901760
        %521 = vmatpush1.msra.mxu0 %v520
        %522 = vmatprep.subr.mxu0 0.0
        %v523 = vand.u32 %v269, 4294901760
        %524 = vmatpush1.msra.mxu0 %v523
        %525 = vmatprep.subr.mxu0 0.0
        %v526 = vand.u32 %v268, 4294901760
        %527 = vmatpush1.msra.mxu0 %v526
        %528 = vmatprep.subr.mxu0 0.0
        %v529 = vand.u32 %v267, 4294901760
        %530 = vmatpush1.msra.mxu0 %v529
        %531 = vmatprep.subr.mxu0 0.0
        %v532 = vand.u32 %v266, 4294901760
        %533 = vmatpush1.msra.mxu0 %v532
        %534 = vmatprep.subr.mxu0 0.0
        %v535 = vand.u32 %v265, 4294901760
        %536 = vmatpush1.msra.mxu0 %v535
        %537 = vmatprep.subr.mxu0 0.0
        %v538 = vand.u32 %v264, 4294901760
        %539 = vmatpush1.msra.mxu0 %v538
        %540 = vmatprep.subr.mxu0 0.0
        %v541 = vand.u32 %v263, 4294901760
        %542 = vmatpush1.msra.mxu0 %v541
        %543 = vmatprep.subr.mxu0 0.0
        %v544 = vand.u32 %v262, 4294901760
        %545 = vmatpush1.msra.mxu0 %v544
        %546 = vmatprep.subr.mxu0 0.0
        %v547 = vand.u32 %v261, 4294901760
        %548 = vmatpush1.msra.mxu0 %v547
        %549 = vmatprep.subr.mxu0 0.0
        %v550 = vand.u32 %v260, 4294901760
        %551 = vmatpush1.msra.mxu0 %v550
        %552 = vmatprep.subr.mxu0 0.0
        %v553 = vand.u32 %v259, 4294901760
        %554 = vmatpush1.msra.mxu0 %v553
        %555 = vmatprep.subr.mxu0 0.0
        %556 = vmatpush2.msra.mxu0 0.0
        %557 = vmatprep.subr.mxu0 0.0
        %558 = vmatpush2.msra.mxu0 0.0
        %559 = vmatprep.subr.mxu0 0.0
        %560 = vmatpush2.msra.mxu0 0.0
        %561 = vmatprep.subr.mxu0 0.0
        %562 = vmatpush2.msra.mxu0 0.0
        %563 = vmatprep.subr.mxu0 0.0
        %564 = vmatpush2.msra.mxu0 0.0
        %565 = vmatprep.subr.mxu0 0.0
        %566 = vmatpush2.msra.mxu0 0.0
        %567 = vmatprep.subr.mxu0 0.0
        %568 = vmatpush2.msra.mxu0 0.0
        %569 = vmatprep.subr.mxu0 0.0
        %570 = vmatpush2.msra.mxu0 0.0
        %571 = vmatprep.subr.mxu0 0.0
        %572 = vmatpush2.msra.mxu0 0.0
        %573 = vmatprep.subr.mxu0 0.0
        %574 = vmatpush2.msra.mxu0 0.0
        %575 = vmatprep.subr.mxu0 0.0
        %576 = vmatpush2.msra.mxu0 0.0
        %577 = vmatprep.subr.mxu0 0.0
        %578 = vmatpush2.msra.mxu0 0.0
        %579 = vmatprep.subr.mxu0 0.0
        %580 = vmatpush2.msra.mxu0 0.0
        %581 = vmatprep.subr.mxu0 0.0
        %582 = vmatpush2.msra.mxu0 0.0
        %583 = vmatprep.subr.mxu0 0.0
        %584 = vmatpush2.msra.mxu0 0.0
        %585 = vmatprep.subr.mxu0 0.0
        %586 = vmatpush2.msra.mxu0 0.0
        %587 = vmatprep.mubr.f32.mxu0 0.0
        %v588 = vand.u32 %v275, 4294901760
        %v589 = vsub.f32 %v275, %v588
        %v590 = vand.u32 %v589, 4294901760
        %v591 = vsub.f32 %v589, %v590
        %v592 = vand.u32 %v591, 4294901760
        %593 = vmatmul.mubr.f32.gmra.mxu0 %v592
        %v594 = vpop.f32.mrf.mxu0
        %v595 = vadd.f32 0.0, %v594
        %v596 = vpop.f32.mrf.mxu0
        %597 = vmatprep.mubr.f32.mxu0 0.0
        %v598 = vand.u32 %v276, 4294901760
        %v599 = vsub.f32 %v276, %v598
        %v600 = vand.u32 %v599, 4294901760
        %v601 = vsub.f32 %v599, %v600
        %v602 = vand.u32 %v601, 4294901760
        %603 = vmatmul.mubr.f32.gmra.mxu0 %v602
        %v604 = vpop.f32.mrf.mxu0
        %v605 = vadd.f32 0.0, %v604
        %v606 = vpop.f32.mrf.mxu0
        %607 = vmatprep.mubr.f32.mxu0 0.0
        %v608 = vand.u32 %v277, 4294901760
        %v609 = vsub.f32 %v277, %v608
        %v610 = vand.u32 %v609, 4294901760
        %v611 = vsub.f32 %v609, %v610
        %v612 = vand.u32 %v611, 4294901760
        %613 = vmatmul.mubr.f32.gmra.mxu0 %v612
        %v614 = vpop.f32.mrf.mxu0
        %v615 = vadd.f32 0.0, %v614
        %v616 = vpop.f32.mrf.mxu0
        %617 = vmatprep.mubr.f32.mxu0 0.0
        %v618 = vand.u32 %v278, 4294901760
        %v619 = vsub.f32 %v278, %v618
        %v620 = vand.u32 %v619, 4294901760
        %v621 = vsub.f32 %v619, %v620
        %v622 = vand.u32 %v621, 4294901760
        %623 = vmatmul.mubr.f32.gmra.mxu0 %v622
        %v624 = vpop.f32.mrf.mxu0
        %v625 = vadd.f32 0.0, %v624
        %v626 = vpop.f32.mrf.mxu0
        %627 = vdwg.mxu0
        %628 = vmatprep.subr.mxu0 0.0
        %v629 = vand.u32 %v274, 4294901760
        %v630 = vsub.f32 %v274, %v629
        %v631 = vand.u32 %v630, 4294901760
        %v632 = vsub.f32 %v630, %v631
        %v633 = vand.u32 %v632, 4294901760
        %634 = vmatpush1.msra.mxu0 %v633
        %635 = vmatprep.subr.mxu0 0.0
        %v636 = vand.u32 %v273, 4294901760
        %v637 = vsub.f32 %v273, %v636
        %v638 = vand.u32 %v637, 4294901760
        %v639 = vsub.f32 %v637, %v638
        %v640 = vand.u32 %v639, 4294901760
        %641 = vmatpush1.msra.mxu0 %v640
        %642 = vmatprep.subr.mxu0 0.0
        %v643 = vand.u32 %v272, 4294901760
        %v644 = vsub.f32 %v272, %v643
        %v645 = vand.u32 %v644, 4294901760
        %v646 = vsub.f32 %v644, %v645
        %v647 = vand.u32 %v646, 4294901760
        %648 = vmatpush1.msra.mxu0 %v647
        %649 = vmatprep.subr.mxu0 0.0
        %v650 = vand.u32 %v271, 4294901760
        %v651 = vsub.f32 %v271, %v650
        %v652 = vand.u32 %v651, 4294901760
        %v653 = vsub.f32 %v651, %v652
        %v654 = vand.u32 %v653, 4294901760
        %655 = vmatpush1.msra.mxu0 %v654
        %656 = vmatprep.subr.mxu0 0.0
        %v657 = vand.u32 %v270, 4294901760
        %v658 = vsub.f32 %v270, %v657
        %v659 = vand.u32 %v658, 4294901760
        %v660 = vsub.f32 %v658, %v659
        %v661 = vand.u32 %v660, 4294901760
        %662 = vmatpush1.msra.mxu0 %v661
        %663 = vmatprep.subr.mxu0 0.0
        %v664 = vand.u32 %v269, 4294901760
        %v665 = vsub.f32 %v269, %v664
        %v666 = vand.u32 %v665, 4294901760
        %v667 = vsub.f32 %v665, %v666
        %v668 = vand.u32 %v667, 4294901760
        %669 = vmatpush1.msra.mxu0 %v668
        %670 = vmatprep.subr.mxu0 0.0
        %v671 = vand.u32 %v268, 4294901760
        %v672 = vsub.f32 %v268, %v671
        %v673 = vand.u32 %v672, 4294901760
        %v674 = vsub.f32 %v672, %v673
        %v675 = vand.u32 %v674, 4294901760
        %676 = vmatpush1.msra.mxu0 %v675
        %677 = vmatprep.subr.mxu0 0.0
        %v678 = vand.u32 %v267, 4294901760
        %v679 = vsub.f32 %v267, %v678
        %v680 = vand.u32 %v679, 4294901760
        %v681 = vsub.f32 %v679, %v680
        %v682 = vand.u32 %v681, 4294901760
        %683 = vmatpush1.msra.mxu0 %v682
        %684 = vmatprep.subr.mxu0 0.0
        %v685 = vand.u32 %v266, 4294901760
        %v686 = vsub.f32 %v266, %v685
        %v687 = vand.u32 %v686, 4294901760
        %v688 = vsub.f32 %v686, %v687
        %v689 = vand.u32 %v688, 4294901760
        %690 = vmatpush1.msra.mxu0 %v689
        %691 = vmatprep.subr.mxu0 0.0
        %v692 = vand.u32 %v265, 4294901760
        %v693 = vsub.f32 %v265, %v692
        %v694 = vand.u32 %v693, 4294901760
        %v695 = vsub.f32 %v693, %v694
        %v696 = vand.u32 %v695, 4294901760
        %697 = vmatpush1.msra.mxu0 %v696
        %698 = vmatprep.subr.mxu0 0.0
        %v699 = vand.u32 %v264, 4294901760
        %v700 = vsub.f32 %v264, %v699
        %v701 = vand.u32 %v700, 4294901760
        %v702 = vsub.f32 %v700, %v701
        %v703 = vand.u32 %v702, 4294901760
        %704 = vmatpush1.msra.mxu0 %v703
        %705 = vmatprep.subr.mxu0 0.0
        %v706 = vand.u32 %v263, 4294901760
        %v707 = vsub.f32 %v263, %v706
        %v708 = vand.u32 %v707, 4294901760
        %v709 = vsub.f32 %v707, %v708
        %v710 = vand.u32 %v709, 4294901760
        %711 = vmatpush1.msra.mxu0 %v710
        %712 = vmatprep.subr.mxu0 0.0
        %v713 = vand.u32 %v262, 4294901760
        %v714 = vsub.f32 %v262, %v713
        %v715 = vand.u32 %v714, 4294901760
        %v716 = vsub.f32 %v714, %v715
        %v717 = vand.u32 %v716, 4294901760
        %718 = vmatpush1.msra.mxu0 %v717
        %719 = vmatprep.subr.mxu0 0.0
        %v720 = vand.u32 %v261, 4294901760
        %v721 = vsub.f32 %v261, %v720
        %v722 = vand.u32 %v721, 4294901760
        %v723 = vsub.f32 %v721, %v722
        %v724 = vand.u32 %v723, 4294901760
        %725 = vmatpush1.msra.mxu0 %v724
        %726 = vmatprep.subr.mxu0 0.0
        %v727 = vand.u32 %v260, 4294901760
        %v728 = vsub.f32 %v260, %v727
        %v729 = vand.u32 %v728, 4294901760
        %v730 = vsub.f32 %v728, %v729
        %v731 = vand.u32 %v730, 4294901760
        %732 = vmatpush1.msra.mxu0 %v731
        %733 = vmatprep.subr.mxu0 0.0
        %v734 = vand.u32 %v259, 4294901760
        %v735 = vsub.f32 %v259, %v734
        %v736 = vand.u32 %v735, 4294901760
        %v737 = vsub.f32 %v735, %v736
        %v738 = vand.u32 %v737, 4294901760
        %739 = vmatpush1.msra.mxu0 %v738
        %740 = vmatprep.subr.mxu0 0.0
        %741 = vmatpush2.msra.mxu0 0.0
        %742 = vmatprep.subr.mxu0 0.0
        %743 = vmatpush2.msra.mxu0 0.0
        %744 = vmatprep.subr.mxu0 0.0
        %745 = vmatpush2.msra.mxu0 0.0
        %746 = vmatprep.subr.mxu0 0.0
        %747 = vmatpush2.msra.mxu0 0.0
        %748 = vmatprep.subr.mxu0 0.0
        %749 = vmatpush2.msra.mxu0 0.0
        %750 = vmatprep.subr.mxu0 0.0
        %751 = vmatpush2.msra.mxu0 0.0
        %752 = vmatprep.subr.mxu0 0.0
        %753 = vmatpush2.msra.mxu0 0.0
        %754 = vmatprep.subr.mxu0 0.0
        %755 = vmatpush2.msra.mxu0 0.0
        %756 = vmatprep.subr.mxu0 0.0
        %757 = vmatpush2.msra.mxu0 0.0
        %758 = vmatprep.subr.mxu0 0.0
        %759 = vmatpush2.msra.mxu0 0.0
        %760 = vmatprep.subr.mxu0 0.0
        %761 = vmatpush2.msra.mxu0 0.0
        %762 = vmatprep.subr.mxu0 0.0
        %763 = vmatpush2.msra.mxu0 0.0
        %764 = vmatprep.subr.mxu0 0.0
        %765 = vmatpush2.msra.mxu0 0.0
        %766 = vmatprep.subr.mxu0 0.0
        %767 = vmatpush2.msra.mxu0 0.0
        %768 = vmatprep.subr.mxu0 0.0
        %769 = vmatpush2.msra.mxu0 0.0
        %770 = vmatprep.subr.mxu0 0.0
        %771 = vmatpush2.msra.mxu0 0.0
        %772 = vmatprep.mubr.f32.mxu0 0.0
        %v773 = vand.u32 %v275, 4294901760
        %774 = vmatmul.mubr.f32.gmra.mxu0 %v773
        %v775 = vpop.f32.mrf.mxu0
        %v776 = vadd.f32 %v595, %v775
        %v777 = vpop.f32.mrf.mxu0
        %778 = vmatprep.mubr.f32.mxu0 0.0
        %v779 = vand.u32 %v276, 4294901760
        %780 = vmatmul.mubr.f32.gmra.mxu0 %v779
        %v781 = vpop.f32.mrf.mxu0
        %v782 = vadd.f32 %v605, %v781
        %v783 = vpop.f32.mrf.mxu0
        %784 = vmatprep.mubr.f32.mxu0 0.0
        %v785 = vand.u32 %v277, 4294901760
        %786 = vmatmul.mubr.f32.gmra.mxu0 %v785
        %v787 = vpop.f32.mrf.mxu0
        %v788 = vadd.f32 %v615, %v787
        %v789 = vpop.f32.mrf.mxu0
        %790 = vmatprep.mubr.f32.mxu0 0.0
        %v791 = vand.u32 %v278, 4294901760
        %792 = vmatmul.mubr.f32.gmra.mxu0 %v791
        %v793 = vpop.f32.mrf.mxu0
        %v794 = vadd.f32 %v625, %v793
        %v795 = vpop.f32.mrf.mxu0
        %796 = vdwg.mxu0
        %797 = vmatprep.subr.mxu0 0.0
        %v798 = vand.u32 %v274, 4294901760
        %v799 = vsub.f32 %v274, %v798
        %800 = vmatpush1.msra.mxu0 %v799
        %801 = vmatprep.subr.mxu0 0.0
        %v802 = vand.u32 %v273, 4294901760
        %v803 = vsub.f32 %v273, %v802
        %804 = vmatpush1.msra.mxu0 %v803
        %805 = vmatprep.subr.mxu0 0.0
        %v806 = vand.u32 %v272, 4294901760
        %v807 = vsub.f32 %v272, %v806
        %808 = vmatpush1.msra.mxu0 %v807
        %809 = vmatprep.subr.mxu0 0.0
        %v810 = vand.u32 %v271, 4294901760
        %v811 = vsub.f32 %v271, %v810
        %812 = vmatpush1.msra.mxu0 %v811
        %813 = vmatprep.subr.mxu0 0.0
        %v814 = vand.u32 %v270, 4294901760
        %v815 = vsub.f32 %v270, %v814
        %816 = vmatpush1.msra.mxu0 %v815
        %817 = vmatprep.subr.mxu0 0.0
        %v818 = vand.u32 %v269, 4294901760
        %v819 = vsub.f32 %v269, %v818
        %820 = vmatpush1.msra.mxu0 %v819
        %821 = vmatprep.subr.mxu0 0.0
        %v822 = vand.u32 %v268, 4294901760
        %v823 = vsub.f32 %v268, %v822
        %824 = vmatpush1.msra.mxu0 %v823
        %825 = vmatprep.subr.mxu0 0.0
        %v826 = vand.u32 %v267, 4294901760
        %v827 = vsub.f32 %v267, %v826
        %828 = vmatpush1.msra.mxu0 %v827
        %829 = vmatprep.subr.mxu0 0.0
        %v830 = vand.u32 %v266, 4294901760
        %v831 = vsub.f32 %v266, %v830
        %832 = vmatpush1.msra.mxu0 %v831
        %833 = vmatprep.subr.mxu0 0.0
        %v834 = vand.u32 %v265, 4294901760
        %v835 = vsub.f32 %v265, %v834
        %836 = vmatpush1.msra.mxu0 %v835
        %837 = vmatprep.subr.mxu0 0.0
        %v838 = vand.u32 %v264, 4294901760
        %v839 = vsub.f32 %v264, %v838
        %840 = vmatpush1.msra.mxu0 %v839
        %841 = vmatprep.subr.mxu0 0.0
        %v842 = vand.u32 %v263, 4294901760
        %v843 = vsub.f32 %v263, %v842
        %844 = vmatpush1.msra.mxu0 %v843
        %845 = vmatprep.subr.mxu0 0.0
        %v846 = vand.u32 %v262, 4294901760
        %v847 = vsub.f32 %v262, %v846
        %848 = vmatpush1.msra.mxu0 %v847
        %849 = vmatprep.subr.mxu0 0.0
        %v850 = vand.u32 %v261, 4294901760
        %v851 = vsub.f32 %v261, %v850
        %852 = vmatpush1.msra.mxu0 %v851
        %853 = vmatprep.subr.mxu0 0.0
        %v854 = vand.u32 %v260, 4294901760
        %v855 = vsub.f32 %v260, %v854
        %856 = vmatpush1.msra.mxu0 %v855
        %857 = vmatprep.subr.mxu0 0.0
        %v858 = vand.u32 %v259, 4294901760
        %v859 = vsub.f32 %v259, %v858
        %860 = vmatpush1.msra.mxu0 %v859
        %861 = vmatprep.subr.mxu0 0.0
        %862 = vmatpush2.msra.mxu0 0.0
        %863 = vmatprep.subr.mxu0 0.0
        %864 = vmatpush2.msra.mxu0 0.0
        %865 = vmatprep.subr.mxu0 0.0
        %866 = vmatpush2.msra.mxu0 0.0
        %867 = vmatprep.subr.mxu0 0.0
        %868 = vmatpush2.msra.mxu0 0.0
        %869 = vmatprep.subr.mxu0 0.0
        %870 = vmatpush2.msra.mxu0 0.0
        %871 = vmatprep.subr.mxu0 0.0
        %872 = vmatpush2.msra.mxu0 0.0
        %873 = vmatprep.subr.mxu0 0.0
        %874 = vmatpush2.msra.mxu0 0.0
        %875 = vmatprep.subr.mxu0 0.0
        %876 = vmatpush2.msra.mxu0 0.0
        %877 = vmatprep.subr.mxu0 0.0
        %878 = vmatpush2.msra.mxu0 0.0
        %879 = vmatprep.subr.mxu0 0.0
        %880 = vmatpush2.msra.mxu0 0.0
        %881 = vmatprep.subr.mxu0 0.0
        %882 = vmatpush2.msra.mxu0 0.0
        %883 = vmatprep.subr.mxu0 0.0
        %884 = vmatpush2.msra.mxu0 0.0
        %885 = vmatprep.subr.mxu0 0.0
        %886 = vmatpush2.msra.mxu0 0.0
        %887 = vmatprep.subr.mxu0 0.0
        %888 = vmatpush2.msra.mxu0 0.0
        %889 = vmatprep.subr.mxu0 0.0
        %890 = vmatpush2.msra.mxu0 0.0
        %891 = vmatprep.subr.mxu0 0.0
        %892 = vmatpush2.msra.mxu0 0.0
        %893 = vmatprep.mubr.f32.mxu0 0.0
        %v894 = vand.u32 %v275, 4294901760
        %v895 = vsub.f32 %v275, %v894
        %896 = vmatmul.mubr.f32.gmra.mxu0 %v895
        %v897 = vpop.f32.mrf.mxu0
        %v898 = vadd.f32 %v776, %v897
        %v899 = vpop.f32.mrf.mxu0
        %900 = vmatprep.mubr.f32.mxu0 0.0
        %v901 = vand.u32 %v276, 4294901760
        %v902 = vsub.f32 %v276, %v901
        %903 = vmatmul.mubr.f32.gmra.mxu0 %v902
        %v904 = vpop.f32.mrf.mxu0
        %v905 = vadd.f32 %v782, %v904
        %v906 = vpop.f32.mrf.mxu0
        %907 = vmatprep.mubr.f32.mxu0 0.0
        %v908 = vand.u32 %v277, 4294901760
        %v909 = vsub.f32 %v277, %v908
        %910 = vmatmul.mubr.f32.gmra.mxu0 %v909
        %v911 = vpop.f32.mrf.mxu0
        %v912 = vadd.f32 %v788, %v911
        %v913 = vpop.f32.mrf.mxu0
        %914 = vmatprep.mubr.f32.mxu0 0.0
        %v915 = vand.u32 %v278, 4294901760
        %v916 = vsub.f32 %v278, %v915
        %917 = vmatmul.mubr.f32.gmra.mxu0 %v916
        %v918 = vpop.f32.mrf.mxu0
        %v919 = vadd.f32 %v794, %v918
        %v920 = vpop.f32.mrf.mxu0
        %921 = vdwg.mxu0
        %922 = vmatprep.subr.mxu0 0.0
        %v923 = vand.u32 %v274, 4294901760
        %924 = vmatpush1.msra.mxu0 %v923
        %925 = vmatprep.subr.mxu0 0.0
        %v926 = vand.u32 %v273, 4294901760
        %927 = vmatpush1.msra.mxu0 %v926
        %928 = vmatprep.subr.mxu0 0.0
        %v929 = vand.u32 %v272, 4294901760
        %930 = vmatpush1.msra.mxu0 %v929
        %931 = vmatprep.subr.mxu0 0.0
        %v932 = vand.u32 %v271, 4294901760
        %933 = vmatpush1.msra.mxu0 %v932
        %934 = vmatprep.subr.mxu0 0.0
        %v935 = vand.u32 %v270, 4294901760
        %936 = vmatpush1.msra.mxu0 %v935
        %937 = vmatprep.subr.mxu0 0.0
        %v938 = vand.u32 %v269, 4294901760
        %939 = vmatpush1.msra.mxu0 %v938
        %940 = vmatprep.subr.mxu0 0.0
        %v941 = vand.u32 %v268, 4294901760
        %942 = vmatpush1.msra.mxu0 %v941
        %943 = vmatprep.subr.mxu0 0.0
        %v944 = vand.u32 %v267, 4294901760
        %945 = vmatpush1.msra.mxu0 %v944
        %946 = vmatprep.subr.mxu0 0.0
        %v947 = vand.u32 %v266, 4294901760
        %948 = vmatpush1.msra.mxu0 %v947
        %949 = vmatprep.subr.mxu0 0.0
        %v950 = vand.u32 %v265, 4294901760
        %951 = vmatpush1.msra.mxu0 %v950
        %952 = vmatprep.subr.mxu0 0.0
        %v953 = vand.u32 %v264, 4294901760
        %954 = vmatpush1.msra.mxu0 %v953
        %955 = vmatprep.subr.mxu0 0.0
        %v956 = vand.u32 %v263, 4294901760
        %957 = vmatpush1.msra.mxu0 %v956
        %958 = vmatprep.subr.mxu0 0.0
        %v959 = vand.u32 %v262, 4294901760
        %960 = vmatpush1.msra.mxu0 %v959
        %961 = vmatprep.subr.mxu0 0.0
        %v962 = vand.u32 %v261, 4294901760
        %963 = vmatpush1.msra.mxu0 %v962
        %964 = vmatprep.subr.mxu0 0.0
        %v965 = vand.u32 %v260, 4294901760
        %966 = vmatpush1.msra.mxu0 %v965
        %967 = vmatprep.subr.mxu0 0.0
        %v968 = vand.u32 %v259, 4294901760
        %969 = vmatpush1.msra.mxu0 %v968
        %970 = vmatprep.subr.mxu0 0.0
        %971 = vmatpush2.msra.mxu0 0.0
        %972 = vmatprep.subr.mxu0 0.0
        %973 = vmatpush2.msra.mxu0 0.0
        %974 = vmatprep.subr.mxu0 0.0
        %975 = vmatpush2.msra.mxu0 0.0
        %976 = vmatprep.subr.mxu0 0.0
        %977 = vmatpush2.msra.mxu0 0.0
        %978 = vmatprep.subr.mxu0 0.0
        %979 = vmatpush2.msra.mxu0 0.0
        %980 = vmatprep.subr.mxu0 0.0
        %981 = vmatpush2.msra.mxu0 0.0
        %982 = vmatprep.subr.mxu0 0.0
        %983 = vmatpush2.msra.mxu0 0.0
        %984 = vmatprep.subr.mxu0 0.0
        %985 = vmatpush2.msra.mxu0 0.0
        %986 = vmatprep.subr.mxu0 0.0
        %987 = vmatpush2.msra.mxu0 0.0
        %988 = vmatprep.subr.mxu0 0.0
        %989 = vmatpush2.msra.mxu0 0.0
        %990 = vmatprep.subr.mxu0 0.0
        %991 = vmatpush2.msra.mxu0 0.0
        %992 = vmatprep.subr.mxu0 0.0
        %993 = vmatpush2.msra.mxu0 0.0
        %994 = vmatprep.subr.mxu0 0.0
        %995 = vmatpush2.msra.mxu0 0.0
        %996 = vmatprep.subr.mxu0 0.0
        %997 = vmatpush2.msra.mxu0 0.0
        %998 = vmatprep.subr.mxu0 0.0
        %999 = vmatpush2.msra.mxu0 0.0
        %1000 = vmatprep.subr.mxu0 0.0
        %1001 = vmatpush2.msra.mxu0 0.0
        %1002 = vmatprep.mubr.f32.mxu0 0.0
        %v1003 = vand.u32 %v275, 4294901760
        %v1004 = vsub.f32 %v275, %v1003
        %v1005 = vand.u32 %v1004, 4294901760
        %1006 = vmatmul.mubr.f32.gmra.mxu0 %v1005
        %v1007 = vpop.f32.mrf.mxu0
        %v1008 = vadd.f32 %v898, %v1007
        %v1009 = vpop.f32.mrf.mxu0
        %1010 = vmatprep.mubr.f32.mxu0 0.0
        %v1011 = vand.u32 %v276, 4294901760
        %v1012 = vsub.f32 %v276, %v1011
        %v1013 = vand.u32 %v1012, 4294901760
        %1014 = vmatmul.mubr.f32.gmra.mxu0 %v1013
        %v1015 = vpop.f32.mrf.mxu0
        %v1016 = vadd.f32 %v905, %v1015
        %v1017 = vpop.f32.mrf.mxu0
        %1018 = vmatprep.mubr.f32.mxu0 0.0
        %v1019 = vand.u32 %v277, 4294901760
        %v1020 = vsub.f32 %v277, %v1019
        %v1021 = vand.u32 %v1020, 4294901760
        %1022 = vmatmul.mubr.f32.gmra.mxu0 %v1021
        %v1023 = vpop.f32.mrf.mxu0
        %v1024 = vadd.f32 %v912, %v1023
        %v1025 = vpop.f32.mrf.mxu0
        %1026 = vmatprep.mubr.f32.mxu0 0.0
        %v1027 = vand.u32 %v278, 4294901760
        %v1028 = vsub.f32 %v278, %v1027
        %v1029 = vand.u32 %v1028, 4294901760
        %1030 = vmatmul.mubr.f32.gmra.mxu0 %v1029
        %v1031 = vpop.f32.mrf.mxu0
        %v1032 = vadd.f32 %v919, %v1031
        %v1033 = vpop.f32.mrf.mxu0
        %1034 = vdwg.mxu0
        %1035 = vmatprep.subr.mxu0 0.0
        %v1036 = vand.u32 %v274, 4294901760
        %v1037 = vsub.f32 %v274, %v1036
        %v1038 = vand.u32 %v1037, 4294901760
        %1039 = vmatpush1.msra.mxu0 %v1038
        %1040 = vmatprep.subr.mxu0 0.0
        %v1041 = vand.u32 %v273, 4294901760
        %v1042 = vsub.f32 %v273, %v1041
        %v1043 = vand.u32 %v1042, 4294901760
        %1044 = vmatpush1.msra.mxu0 %v1043
        %1045 = vmatprep.subr.mxu0 0.0
        %v1046 = vand.u32 %v272, 4294901760
        %v1047 = vsub.f32 %v272, %v1046
        %v1048 = vand.u32 %v1047, 4294901760
        %1049 = vmatpush1.msra.mxu0 %v1048
        %1050 = vmatprep.subr.mxu0 0.0
        %v1051 = vand.u32 %v271, 4294901760
        %v1052 = vsub.f32 %v271, %v1051
        %v1053 = vand.u32 %v1052, 4294901760
        %1054 = vmatpush1.msra.mxu0 %v1053
        %1055 = vmatprep.subr.mxu0 0.0
        %v1056 = vand.u32 %v270, 4294901760
        %v1057 = vsub.f32 %v270, %v1056
        %v1058 = vand.u32 %v1057, 4294901760
        %1059 = vmatpush1.msra.mxu0 %v1058
        %1060 = vmatprep.subr.mxu0 0.0
        %v1061 = vand.u32 %v269, 4294901760
        %v1062 = vsub.f32 %v269, %v1061
        %v1063 = vand.u32 %v1062, 4294901760
        %1064 = vmatpush1.msra.mxu0 %v1063
        %1065 = vmatprep.subr.mxu0 0.0
        %v1066 = vand.u32 %v268, 4294901760
        %v1067 = vsub.f32 %v268, %v1066
        %v1068 = vand.u32 %v1067, 4294901760
        %1069 = vmatpush1.msra.mxu0 %v1068
        %1070 = vmatprep.subr.mxu0 0.0
        %v1071 = vand.u32 %v267, 4294901760
        %v1072 = vsub.f32 %v267, %v1071
        %v1073 = vand.u32 %v1072, 4294901760
        %1074 = vmatpush1.msra.mxu0 %v1073
        %1075 = vmatprep.subr.mxu0 0.0
        %v1076 = vand.u32 %v266, 4294901760
        %v1077 = vsub.f32 %v266, %v1076
        %v1078 = vand.u32 %v1077, 4294901760
        %1079 = vmatpush1.msra.mxu0 %v1078
        %1080 = vmatprep.subr.mxu0 0.0
        %v1081 = vand.u32 %v265, 4294901760
        %v1082 = vsub.f32 %v265, %v1081
        %v1083 = vand.u32 %v1082, 4294901760
        %1084 = vmatpush1.msra.mxu0 %v1083
        %1085 = vmatprep.subr.mxu0 0.0
        %v1086 = vand.u32 %v264, 4294901760
        %v1087 = vsub.f32 %v264, %v1086
        %v1088 = vand.u32 %v1087, 4294901760
        %1089 = vmatpush1.msra.mxu0 %v1088
        %1090 = vmatprep.subr.mxu0 0.0
        %v1091 = vand.u32 %v263, 4294901760
        %v1092 = vsub.f32 %v263, %v1091
        %v1093 = vand.u32 %v1092, 4294901760
        %1094 = vmatpush1.msra.mxu0 %v1093
        %1095 = vmatprep.subr.mxu0 0.0
        %v1096 = vand.u32 %v262, 4294901760
        %v1097 = vsub.f32 %v262, %v1096
        %v1098 = vand.u32 %v1097, 4294901760
        %1099 = vmatpush1.msra.mxu0 %v1098
        %1100 = vmatprep.subr.mxu0 0.0
        %v1101 = vand.u32 %v261, 4294901760
        %v1102 = vsub.f32 %v261, %v1101
        %v1103 = vand.u32 %v1102, 4294901760
        %1104 = vmatpush1.msra.mxu0 %v1103
        %1105 = vmatprep.subr.mxu0 0.0
        %v1106 = vand.u32 %v260, 4294901760
        %v1107 = vsub.f32 %v260, %v1106
        %v1108 = vand.u32 %v1107, 4294901760
        %1109 = vmatpush1.msra.mxu0 %v1108
        %1110 = vmatprep.subr.mxu0 0.0
        %v1111 = vand.u32 %v259, 4294901760
        %v1112 = vsub.f32 %v259, %v1111
        %v1113 = vand.u32 %v1112, 4294901760
        %1114 = vmatpush1.msra.mxu0 %v1113
        %1115 = vmatprep.subr.mxu0 0.0
        %1116 = vmatpush2.msra.mxu0 0.0
        %1117 = vmatprep.subr.mxu0 0.0
        %1118 = vmatpush2.msra.mxu0 0.0
        %1119 = vmatprep.subr.mxu0 0.0
        %1120 = vmatpush2.msra.mxu0 0.0
        %1121 = vmatprep.subr.mxu0 0.0
        %1122 = vmatpush2.msra.mxu0 0.0
        %1123 = vmatprep.subr.mxu0 0.0
        %1124 = vmatpush2.msra.mxu0 0.0
        %1125 = vmatprep.subr.mxu0 0.0
        %1126 = vmatpush2.msra.mxu0 0.0
        %1127 = vmatprep.subr.mxu0 0.0
        %1128 = vmatpush2.msra.mxu0 0.0
        %1129 = vmatprep.subr.mxu0 0.0
        %1130 = vmatpush2.msra.mxu0 0.0
        %1131 = vmatprep.subr.mxu0 0.0
        %1132 = vmatpush2.msra.mxu0 0.0
        %1133 = vmatprep.subr.mxu0 0.0
        %1134 = vmatpush2.msra.mxu0 0.0
        %1135 = vmatprep.subr.mxu0 0.0
        %1136 = vmatpush2.msra.mxu0 0.0
        %1137 = vmatprep.subr.mxu0 0.0
        %1138 = vmatpush2.msra.mxu0 0.0
        %1139 = vmatprep.subr.mxu0 0.0
        %1140 = vmatpush2.msra.mxu0 0.0
        %1141 = vmatprep.subr.mxu0 0.0
        %1142 = vmatpush2.msra.mxu0 0.0
        %1143 = vmatprep.subr.mxu0 0.0
        %1144 = vmatpush2.msra.mxu0 0.0
        %1145 = vmatprep.subr.mxu0 0.0
        %1146 = vmatpush2.msra.mxu0 0.0
        %1147 = vmatprep.mubr.f32.mxu0 0.0
        %v1148 = vand.u32 %v275, 4294901760
        %1149 = vmatmul.mubr.f32.gmra.mxu0 %v1148
        %v1150 = vpop.f32.mrf.mxu0
        %v1151 = vadd.f32 %v1008, %v1150
        %v1152 = vpop.f32.mrf.mxu0
        %1153 = vmatprep.mubr.f32.mxu0 0.0
        %v1154 = vand.u32 %v276, 4294901760
        %1155 = vmatmul.mubr.f32.gmra.mxu0 %v1154
        %v1156 = vpop.f32.mrf.mxu0
        %v1157 = vadd.f32 %v1016, %v1156
        %v1158 = vpop.f32.mrf.mxu0
        %1159 = vmatprep.mubr.f32.mxu0 0.0
        %v1160 = vand.u32 %v277, 4294901760
        %1161 = vmatmul.mubr.f32.gmra.mxu0 %v1160
        %v1162 = vpop.f32.mrf.mxu0
        %v1163 = vadd.f32 %v1024, %v1162
        %v1164 = vpop.f32.mrf.mxu0
        %1165 = vmatprep.mubr.f32.mxu0 0.0
        %v1166 = vand.u32 %v278, 4294901760
        %1167 = vmatmul.mubr.f32.gmra.mxu0 %v1166
        %v1168 = vpop.f32.mrf.mxu0
        %v1169 = vadd.f32 %v1032, %v1168
        %v1170 = vpop.f32.mrf.mxu0
        %1171 = vdwg.mxu0
        %1172 = vmatprep.subr.mxu0 0.0
        %v1173 = vand.u32 %v274, 4294901760
        %1174 = vmatpush1.msra.mxu0 %v1173
        %1175 = vmatprep.subr.mxu0 0.0
        %v1176 = vand.u32 %v273, 4294901760
        %1177 = vmatpush1.msra.mxu0 %v1176
        %1178 = vmatprep.subr.mxu0 0.0
        %v1179 = vand.u32 %v272, 4294901760
        %1180 = vmatpush1.msra.mxu0 %v1179
        %1181 = vmatprep.subr.mxu0 0.0
        %v1182 = vand.u32 %v271, 4294901760
        %1183 = vmatpush1.msra.mxu0 %v1182
        %1184 = vmatprep.subr.mxu0 0.0
        %v1185 = vand.u32 %v270, 4294901760
        %1186 = vmatpush1.msra.mxu0 %v1185
        %1187 = vmatprep.subr.mxu0 0.0
        %v1188 = vand.u32 %v269, 4294901760
        %1189 = vmatpush1.msra.mxu0 %v1188
        %1190 = vmatprep.subr.mxu0 0.0
        %v1191 = vand.u32 %v268, 4294901760
        %1192 = vmatpush1.msra.mxu0 %v1191
        %1193 = vmatprep.subr.mxu0 0.0
        %v1194 = vand.u32 %v267, 4294901760
        %1195 = vmatpush1.msra.mxu0 %v1194
        %1196 = vmatprep.subr.mxu0 0.0
        %v1197 = vand.u32 %v266, 4294901760
        %1198 = vmatpush1.msra.mxu0 %v1197
        %1199 = vmatprep.subr.mxu0 0.0
        %v1200 = vand.u32 %v265, 4294901760
        %1201 = vmatpush1.msra.mxu0 %v1200
        %1202 = vmatprep.subr.mxu0 0.0
        %v1203 = vand.u32 %v264, 4294901760
        %1204 = vmatpush1.msra.mxu0 %v1203
        %1205 = vmatprep.subr.mxu0 0.0
        %v1206 = vand.u32 %v263, 4294901760
        %1207 = vmatpush1.msra.mxu0 %v1206
        %1208 = vmatprep.subr.mxu0 0.0
        %v1209 = vand.u32 %v262, 4294901760
        %1210 = vmatpush1.msra.mxu0 %v1209
        %1211 = vmatprep.subr.mxu0 0.0
        %v1212 = vand.u32 %v261, 4294901760
        %1213 = vmatpush1.msra.mxu0 %v1212
        %1214 = vmatprep.subr.mxu0 0.0
        %v1215 = vand.u32 %v260, 4294901760
        %1216 = vmatpush1.msra.mxu0 %v1215
        %1217 = vmatprep.subr.mxu0 0.0
        %v1218 = vand.u32 %v259, 4294901760
        %1219 = vmatpush1.msra.mxu0 %v1218
        %1220 = vmatprep.subr.mxu0 0.0
        %1221 = vmatpush2.msra.mxu0 0.0
        %1222 = vmatprep.subr.mxu0 0.0
        %1223 = vmatpush2.msra.mxu0 0.0
        %1224 = vmatprep.subr.mxu0 0.0
        %1225 = vmatpush2.msra.mxu0 0.0
        %1226 = vmatprep.subr.mxu0 0.0
        %1227 = vmatpush2.msra.mxu0 0.0
        %1228 = vmatprep.subr.mxu0 0.0
        %1229 = vmatpush2.msra.mxu0 0.0
        %1230 = vmatprep.subr.mxu0 0.0
        %1231 = vmatpush2.msra.mxu0 0.0
        %1232 = vmatprep.subr.mxu0 0.0
        %1233 = vmatpush2.msra.mxu0 0.0
        %1234 = vmatprep.subr.mxu0 0.0
        %1235 = vmatpush2.msra.mxu0 0.0
        %1236 = vmatprep.subr.mxu0 0.0
        %1237 = vmatpush2.msra.mxu0 0.0
        %1238 = vmatprep.subr.mxu0 0.0
        %1239 = vmatpush2.msra.mxu0 0.0
        %1240 = vmatprep.subr.mxu0 0.0
        %1241 = vmatpush2.msra.mxu0 0.0
        %1242 = vmatprep.subr.mxu0 0.0
        %1243 = vmatpush2.msra.mxu0 0.0
        %1244 = vmatprep.subr.mxu0 0.0
        %1245 = vmatpush2.msra.mxu0 0.0
        %1246 = vmatprep.subr.mxu0 0.0
        %1247 = vmatpush2.msra.mxu0 0.0
        %1248 = vmatprep.subr.mxu0 0.0
        %1249 = vmatpush2.msra.mxu0 0.0
        %1250 = vmatprep.subr.mxu0 0.0
        %1251 = vmatpush2.msra.mxu0 0.0
        %1252 = vmatprep.mubr.f32.mxu0 0.0
        %v1253 = vand.u32 %v275, 4294901760
        %1254 = vmatmul.mubr.f32.gmra.mxu0 %v1253
        %v1255 = vpop.f32.mrf.mxu0
        %v1256 = vadd.f32 %v1151, %v1255
        %v1257 = vpop.f32.mrf.mxu0
        %1258 = vmatprep.mubr.f32.mxu0 0.0
        %v1259 = vand.u32 %v276, 4294901760
        %1260 = vmatmul.mubr.f32.gmra.mxu0 %v1259
        %v1261 = vpop.f32.mrf.mxu0
        %v1262 = vadd.f32 %v1157, %v1261
        %v1263 = vpop.f32.mrf.mxu0
        %1264 = vmatprep.mubr.f32.mxu0 0.0
        %v1265 = vand.u32 %v277, 4294901760
        %1266 = vmatmul.mubr.f32.gmra.mxu0 %v1265
        %v1267 = vpop.f32.mrf.mxu0
        %v1268 = vadd.f32 %v1163, %v1267
        %v1269 = vpop.f32.mrf.mxu0
        %1270 = vmatprep.mubr.f32.mxu0 0.0
        %v1271 = vand.u32 %v278, 4294901760
        %1272 = vmatmul.mubr.f32.gmra.mxu0 %v1271
        %v1273 = vpop.f32.mrf.mxu0
        %v1274 = vadd.f32 %v1169, %v1273
        %v1275 = vpop.f32.mrf.mxu0
        %1276 = vdwg.mxu0
        %v1277 = vadd.f32 %v503, %v1256
        %v1278 = vadd.f32 %v504, %v1262
        %v1279 = vadd.f32 %v505, %v1268
        %v1280 = vadd.f32 %v506, %v1274
        %1281 = vst [vmem:[#allocation2] sm:$0xff] %v1277
        %1282 = vst [vmem:[#allocation2 + $0x8] sm:$0xff] %v1278
        %1283 = vst [vmem:[#allocation2 + $0x10] sm:$0xff] %v1279
        %1284 = vst [vmem:[#allocation2 + $0x18] sm:$0xff] %v1280
        %v1285 = vld [vmem:[#allocation3] sm:$0xff]
        %v1286 = vld [vmem:[#allocation3 + $0x8] sm:$0xff]
        %v1287 = vld [vmem:[#allocation3 + $0x10] sm:$0xff]
        %v1288 = vld [vmem:[#allocation3 + $0x18] sm:$0xff]
        %1289 = vmatprep.subr.mxu0 0.0
        %v1290 = vand.u32 %v502, 4294901760
        %1291 = vmatpush1.msra.mxu0 %v1290
        %1292 = vmatprep.subr.mxu0 0.0
        %v1293 = vand.u32 %v501, 4294901760
        %1294 = vmatpush1.msra.mxu0 %v1293
        %1295 = vmatprep.subr.mxu0 0.0
        %v1296 = vand.u32 %v500, 4294901760
        %1297 = vmatpush1.msra.mxu0 %v1296
        %1298 = vmatprep.subr.mxu0 0.0
        %v1299 = vand.u32 %v499, 4294901760
        %1300 = vmatpush1.msra.mxu0 %v1299
        %1301 = vmatprep.subr.mxu0 0.0
        %v1302 = vand.u32 %v498, 4294901760
        %1303 = vmatpush1.msra.mxu0 %v1302
        %1304 = vmatprep.subr.mxu0 0.0
        %v1305 = vand.u32 %v497, 4294901760
        %1306 = vmatpush1.msra.mxu0 %v1305
        %1307 = vmatprep.subr.mxu0 0.0
        %v1308 = vand.u32 %v496, 4294901760
        %1309 = vmatpush1.msra.mxu0 %v1308
        %1310 = vmatprep.subr.mxu0 0.0
        %v1311 = vand.u32 %v495, 4294901760
        %1312 = vmatpush1.msra.mxu0 %v1311
        %1313 = vmatprep.subr.mxu0 0.0
        %v1314 = vand.u32 %v494, 4294901760
        %1315 = vmatpush1.msra.mxu0 %v1314
        %1316 = vmatprep.subr.mxu0 0.0
        %v1317 = vand.u32 %v493, 4294901760
        %1318 = vmatpush1.msra.mxu0 %v1317
        %1319 = vmatprep.subr.mxu0 0.0
        %v1320 = vand.u32 %v492, 4294901760
        %1321 = vmatpush1.msra.mxu0 %v1320
        %1322 = vmatprep.subr.mxu0 0.0
        %v1323 = vand.u32 %v491, 4294901760
        %1324 = vmatpush1.msra.mxu0 %v1323
        %1325 = vmatprep.subr.mxu0 0.0
        %v1326 = vand.u32 %v490, 4294901760
        %1327 = vmatpush1.msra.mxu0 %v1326
        %1328 = vmatprep.subr.mxu0 0.0
        %v1329 = vand.u32 %v489, 4294901760
        %1330 = vmatpush1.msra.mxu0 %v1329
        %1331 = vmatprep.subr.mxu0 0.0
        %v1332 = vand.u32 %v488, 4294901760
        %1333 = vmatpush1.msra.mxu0 %v1332
        %1334 = vmatprep.subr.mxu0 0.0
        %v1335 = vand.u32 %v487, 4294901760
        %1336 = vmatpush1.msra.mxu0 %v1335
        %1337 = vmatprep.subr.mxu0 0.0
        %1338 = vmatpush2.msra.mxu0 0.0
        %1339 = vmatprep.subr.mxu0 0.0
        %1340 = vmatpush2.msra.mxu0 0.0
        %1341 = vmatprep.subr.mxu0 0.0
        %1342 = vmatpush2.msra.mxu0 0.0
        %1343 = vmatprep.subr.mxu0 0.0
        %1344 = vmatpush2.msra.mxu0 0.0
        %1345 = vmatprep.subr.mxu0 0.0
        %1346 = vmatpush2.msra.mxu0 0.0
        %1347 = vmatprep.subr.mxu0 0.0
        %1348 = vmatpush2.msra.mxu0 0.0
        %1349 = vmatprep.subr.mxu0 0.0
        %1350 = vmatpush2.msra.mxu0 0.0
        %1351 = vmatprep.subr.mxu0 0.0
        %1352 = vmatpush2.msra.mxu0 0.0
        %1353 = vmatprep.subr.mxu0 0.0
        %1354 = vmatpush2.msra.mxu0 0.0
        %1355 = vmatprep.subr.mxu0 0.0
        %1356 = vmatpush2.msra.mxu0 0.0
        %1357 = vmatprep.subr.mxu0 0.0
        %1358 = vmatpush2.msra.mxu0 0.0
        %1359 = vmatprep.subr.mxu0 0.0
        %1360 = vmatpush2.msra.mxu0 0.0
        %1361 = vmatprep.subr.mxu0 0.0
        %1362 = vmatpush2.msra.mxu0 0.0
        %1363 = vmatprep.subr.mxu0 0.0
        %1364 = vmatpush2.msra.mxu0 0.0
        %1365 = vmatprep.subr.mxu0 0.0
        %1366 = vmatpush2.msra.mxu0 0.0
        %1367 = vmatprep.subr.mxu0 0.0
        %1368 = vmatpush2.msra.mxu0 0.0
        %1369 = vmatprep.mubr.f32.mxu0 0.0
        %v1370 = vand.u32 %v275, 4294901760
        %v1371 = vsub.f32 %v275, %v1370
        %v1372 = vand.u32 %v1371, 4294901760
        %v1373 = vsub.f32 %v1371, %v1372
        %v1374 = vand.u32 %v1373, 4294901760
        %1375 = vmatmul.mubr.f32.gmra.mxu0 %v1374
        %v1376 = vpop.f32.mrf.mxu0
        %v1377 = vadd.f32 0.0, %v1376
        %v1378 = vpop.f32.mrf.mxu0
        %1379 = vmatprep.mubr.f32.mxu0 0.0
        %v1380 = vand.u32 %v276, 4294901760
        %v1381 = vsub.f32 %v276, %v1380
        %v1382 = vand.u32 %v1381, 4294901760
        %v1383 = vsub.f32 %v1381, %v1382
        %v1384 = vand.u32 %v1383, 4294901760
        %1385 = vmatmul.mubr.f32.gmra.mxu0 %v1384
        %v1386 = vpop.f32.mrf.mxu0
        %v1387 = vadd.f32 0.0, %v1386
        %v1388 = vpop.f32.mrf.mxu0
        %1389 = vmatprep.mubr.f32.mxu0 0.0
        %v1390 = vand.u32 %v277, 4294901760
        %v1391 = vsub.f32 %v277, %v1390
        %v1392 = vand.u32 %v1391, 4294901760
        %v1393 = vsub.f32 %v1391, %v1392
        %v1394 = vand.u32 %v1393, 4294901760
        %1395 = vmatmul.mubr.f32.gmra.mxu0 %v1394
        %v1396 = vpop.f32.mrf.mxu0
        %v1397 = vadd.f32 0.0, %v1396
        %v1398 = vpop.f32.mrf.mxu0
        %1399 = vmatprep.mubr.f32.mxu0 0.0
        %v1400 = vand.u32 %v278, 4294901760
        %v1401 = vsub.f32 %v278, %v1400
        %v1402 = vand.u32 %v1401, 4294901760
        %v1403 = vsub.f32 %v1401, %v1402
        %v1404 = vand.u32 %v1403, 4294901760
        %1405 = vmatmul.mubr.f32.gmra.mxu0 %v1404
        %v1406 = vpop.f32.mrf.mxu0
        %v1407 = vadd.f32 0.0, %v1406
        %v1408 = vpop.f32.mrf.mxu0
        %1409 = vdwg.mxu0
        %1410 = vmatprep.subr.mxu0 0.0
        %v1411 = vand.u32 %v502, 4294901760
        %v1412 = vsub.f32 %v502, %v1411
        %v1413 = vand.u32 %v1412, 4294901760
        %v1414 = vsub.f32 %v1412, %v1413
        %v1415 = vand.u32 %v1414, 4294901760
        %1416 = vmatpush1.msra.mxu0 %v1415
        %1417 = vmatprep.subr.mxu0 0.0
        %v1418 = vand.u32 %v501, 4294901760
        %v1419 = vsub.f32 %v501, %v1418
        %v1420 = vand.u32 %v1419, 4294901760
        %v1421 = vsub.f32 %v1419, %v1420
        %v1422 = vand.u32 %v1421, 4294901760
        %1423 = vmatpush1.msra.mxu0 %v1422
        %1424 = vmatprep.subr.mxu0 0.0
        %v1425 = vand.u32 %v500, 4294901760
        %v1426 = vsub.f32 %v500, %v1425
        %v1427 = vand.u32 %v1426, 4294901760
        %v1428 = vsub.f32 %v1426, %v1427
        %v1429 = vand.u32 %v1428, 4294901760
        %1430 = vmatpush1.msra.mxu0 %v1429
        %1431 = vmatprep.subr.mxu0 0.0
        %v1432 = vand.u32 %v499, 4294901760
        %v1433 = vsub.f32 %v499, %v1432
        %v1434 = vand.u32 %v1433, 4294901760
        %v1435 = vsub.f32 %v1433, %v1434
        %v1436 = vand.u32 %v1435, 4294901760
        %1437 = vmatpush1.msra.mxu0 %v1436
        %1438 = vmatprep.subr.mxu0 0.0
        %v1439 = vand.u32 %v498, 4294901760
        %v1440 = vsub.f32 %v498, %v1439
        %v1441 = vand.u32 %v1440, 4294901760
        %v1442 = vsub.f32 %v1440, %v1441
        %v1443 = vand.u32 %v1442, 4294901760
        %1444 = vmatpush1.msra.mxu0 %v1443
        %1445 = vmatprep.subr.mxu0 0.0
        %v1446 = vand.u32 %v497, 4294901760
        %v1447 = vsub.f32 %v497, %v1446
        %v1448 = vand.u32 %v1447, 4294901760
        %v1449 = vsub.f32 %v1447, %v1448
        %v1450 = vand.u32 %v1449, 4294901760
        %1451 = vmatpush1.msra.mxu0 %v1450
        %1452 = vmatprep.subr.mxu0 0.0
        %v1453 = vand.u32 %v496, 4294901760
        %v1454 = vsub.f32 %v496, %v1453
        %v1455 = vand.u32 %v1454, 4294901760
        %v1456 = vsub.f32 %v1454, %v1455
        %v1457 = vand.u32 %v1456, 4294901760
        %1458 = vmatpush1.msra.mxu0 %v1457
        %1459 = vmatprep.subr.mxu0 0.0
        %v1460 = vand.u32 %v495, 4294901760
        %v1461 = vsub.f32 %v495, %v1460
        %v1462 = vand.u32 %v1461, 4294901760
        %v1463 = vsub.f32 %v1461, %v1462
        %v1464 = vand.u32 %v1463, 4294901760
        %1465 = vmatpush1.msra.mxu0 %v1464
        %1466 = vmatprep.subr.mxu0 0.0
        %v1467 = vand.u32 %v494, 4294901760
        %v1468 = vsub.f32 %v494, %v1467
        %v1469 = vand.u32 %v1468, 4294901760
        %v1470 = vsub.f32 %v1468, %v1469
        %v1471 = vand.u32 %v1470, 4294901760
        %1472 = vmatpush1.msra.mxu0 %v1471
        %1473 = vmatprep.subr.mxu0 0.0
        %v1474 = vand.u32 %v493, 4294901760
        %v1475 = vsub.f32 %v493, %v1474
        %v1476 = vand.u32 %v1475, 4294901760
        %v1477 = vsub.f32 %v1475, %v1476
        %v1478 = vand.u32 %v1477, 4294901760
        %1479 = vmatpush1.msra.mxu0 %v1478
        %1480 = vmatprep.subr.mxu0 0.0
        %v1481 = vand.u32 %v492, 4294901760
        %v1482 = vsub.f32 %v492, %v1481
        %v1483 = vand.u32 %v1482, 4294901760
        %v1484 = vsub.f32 %v1482, %v1483
        %v1485 = vand.u32 %v1484, 4294901760
        %1486 = vmatpush1.msra.mxu0 %v1485
        %1487 = vmatprep.subr.mxu0 0.0
        %v1488 = vand.u32 %v491, 4294901760
        %v1489 = vsub.f32 %v491, %v1488
        %v1490 = vand.u32 %v1489, 4294901760
        %v1491 = vsub.f32 %v1489, %v1490
        %v1492 = vand.u32 %v1491, 4294901760
        %1493 = vmatpush1.msra.mxu0 %v1492
        %1494 = vmatprep.subr.mxu0 0.0
        %v1495 = vand.u32 %v490, 4294901760
        %v1496 = vsub.f32 %v490, %v1495
        %v1497 = vand.u32 %v1496, 4294901760
        %v1498 = vsub.f32 %v1496, %v1497
        %v1499 = vand.u32 %v1498, 4294901760
        %1500 = vmatpush1.msra.mxu0 %v1499
        %1501 = vmatprep.subr.mxu0 0.0
        %v1502 = vand.u32 %v489, 4294901760
        %v1503 = vsub.f32 %v489, %v1502
        %v1504 = vand.u32 %v1503, 4294901760
        %v1505 = vsub.f32 %v1503, %v1504
        %v1506 = vand.u32 %v1505, 4294901760
        %1507 = vmatpush1.msra.mxu0 %v1506
        %1508 = vmatprep.subr.mxu0 0.0
        %v1509 = vand.u32 %v488, 4294901760
        %v1510 = vsub.f32 %v488, %v1509
        %v1511 = vand.u32 %v1510, 4294901760
        %v1512 = vsub.f32 %v1510, %v1511
        %v1513 = vand.u32 %v1512, 4294901760
        %1514 = vmatpush1.msra.mxu0 %v1513
        %1515 = vmatprep.subr.mxu0 0.0
        %v1516 = vand.u32 %v487, 4294901760
        %v1517 = vsub.f32 %v487, %v1516
        %v1518 = vand.u32 %v1517, 4294901760
        %v1519 = vsub.f32 %v1517, %v1518
        %v1520 = vand.u32 %v1519, 4294901760
        %1521 = vmatpush1.msra.mxu0 %v1520
        %1522 = vmatprep.subr.mxu0 0.0
        %1523 = vmatpush2.msra.mxu0 0.0
        %1524 = vmatprep.subr.mxu0 0.0
        %1525 = vmatpush2.msra.mxu0 0.0
        %1526 = vmatprep.subr.mxu0 0.0
        %1527 = vmatpush2.msra.mxu0 0.0
        %1528 = vmatprep.subr.mxu0 0.0
        %1529 = vmatpush2.msra.mxu0 0.0
        %1530 = vmatprep.subr.mxu0 0.0
        %1531 = vmatpush2.msra.mxu0 0.0
        %1532 = vmatprep.subr.mxu0 0.0
        %1533 = vmatpush2.msra.mxu0 0.0
        %1534 = vmatprep.subr.mxu0 0.0
        %1535 = vmatpush2.msra.mxu0 0.0
        %1536 = vmatprep.subr.mxu0 0.0
        %1537 = vmatpush2.msra.mxu0 0.0
        %1538 = vmatprep.subr.mxu0 0.0
        %1539 = vmatpush2.msra.mxu0 0.0
        %1540 = vmatprep.subr.mxu0 0.0
        %1541 = vmatpush2.msra.mxu0 0.0
        %1542 = vmatprep.subr.mxu0 0.0
        %1543 = vmatpush2.msra.mxu0 0.0
        %1544 = vmatprep.subr.mxu0 0.0
        %1545 = vmatpush2.msra.mxu0 0.0
        %1546 = vmatprep.subr.mxu0 0.0
        %1547 = vmatpush2.msra.mxu0 0.0
        %1548 = vmatprep.subr.mxu0 0.0
        %1549 = vmatpush2.msra.mxu0 0.0
        %1550 = vmatprep.subr.mxu0 0.0
        %1551 = vmatpush2.msra.mxu0 0.0
        %1552 = vmatprep.subr.mxu0 0.0
        %1553 = vmatpush2.msra.mxu0 0.0
        %1554 = vmatprep.mubr.f32.mxu0 0.0
        %v1555 = vand.u32 %v275, 4294901760
        %1556 = vmatmul.mubr.f32.gmra.mxu0 %v1555
        %v1557 = vpop.f32.mrf.mxu0
        %v1558 = vadd.f32 %v1377, %v1557
        %v1559 = vpop.f32.mrf.mxu0
        %1560 = vmatprep.mubr.f32.mxu0 0.0
        %v1561 = vand.u32 %v276, 4294901760
        %1562 = vmatmul.mubr.f32.gmra.mxu0 %v1561
        %v1563 = vpop.f32.mrf.mxu0
        %v1564 = vadd.f32 %v1387, %v1563
        %v1565 = vpop.f32.mrf.mxu0
        %1566 = vmatprep.mubr.f32.mxu0 0.0
        %v1567 = vand.u32 %v277, 4294901760
        %1568 = vmatmul.mubr.f32.gmra.mxu0 %v1567
        %v1569 = vpop.f32.mrf.mxu0
        %v1570 = vadd.f32 %v1397, %v1569
        %v1571 = vpop.f32.mrf.mxu0
        %1572 = vmatprep.mubr.f32.mxu0 0.0
        %v1573 = vand.u32 %v278, 4294901760
        %1574 = vmatmul.mubr.f32.gmra.mxu0 %v1573
        %v1575 = vpop.f32.mrf.mxu0
        %v1576 = vadd.f32 %v1407, %v1575
        %v1577 = vpop.f32.mrf.mxu0
        %1578 = vdwg.mxu0
        %1579 = vmatprep.subr.mxu0 0.0
        %v1580 = vand.u32 %v502, 4294901760
        %v1581 = vsub.f32 %v502, %v1580
        %1582 = vmatpush1.msra.mxu0 %v1581
        %1583 = vmatprep.subr.mxu0 0.0
        %v1584 = vand.u32 %v501, 4294901760
        %v1585 = vsub.f32 %v501, %v1584
        %1586 = vmatpush1.msra.mxu0 %v1585
        %1587 = vmatprep.subr.mxu0 0.0
        %v1588 = vand.u32 %v500, 4294901760
        %v1589 = vsub.f32 %v500, %v1588
        %1590 = vmatpush1.msra.mxu0 %v1589
        %1591 = vmatprep.subr.mxu0 0.0
        %v1592 = vand.u32 %v499, 4294901760
        %v1593 = vsub.f32 %v499, %v1592
        %1594 = vmatpush1.msra.mxu0 %v1593
        %1595 = vmatprep.subr.mxu0 0.0
        %v1596 = vand.u32 %v498, 4294901760
        %v1597 = vsub.f32 %v498, %v1596
        %1598 = vmatpush1.msra.mxu0 %v1597
        %1599 = vmatprep.subr.mxu0 0.0
        %v1600 = vand.u32 %v497, 4294901760
        %v1601 = vsub.f32 %v497, %v1600
        %1602 = vmatpush1.msra.mxu0 %v1601
        %1603 = vmatprep.subr.mxu0 0.0
        %v1604 = vand.u32 %v496, 4294901760
        %v1605 = vsub.f32 %v496, %v1604
        %1606 = vmatpush1.msra.mxu0 %v1605
        %1607 = vmatprep.subr.mxu0 0.0
        %v1608 = vand.u32 %v495, 4294901760
        %v1609 = vsub.f32 %v495, %v1608
        %1610 = vmatpush1.msra.mxu0 %v1609
        %1611 = vmatprep.subr.mxu0 0.0
        %v1612 = vand.u32 %v494, 4294901760
        %v1613 = vsub.f32 %v494, %v1612
        %1614 = vmatpush1.msra.mxu0 %v1613
        %1615 = vmatprep.subr.mxu0 0.0
        %v1616 = vand.u32 %v493, 4294901760
        %v1617 = vsub.f32 %v493, %v1616
        %1618 = vmatpush1.msra.mxu0 %v1617
        %1619 = vmatprep.subr.mxu0 0.0
        %v1620 = vand.u32 %v492, 4294901760
        %v1621 = vsub.f32 %v492, %v1620
        %1622 = vmatpush1.msra.mxu0 %v1621
        %1623 = vmatprep.subr.mxu0 0.0
        %v1624 = vand.u32 %v491, 4294901760
        %v1625 = vsub.f32 %v491, %v1624
        %1626 = vmatpush1.msra.mxu0 %v1625
        %1627 = vmatprep.subr.mxu0 0.0
        %v1628 = vand.u32 %v490, 4294901760
        %v1629 = vsub.f32 %v490, %v1628
        %1630 = vmatpush1.msra.mxu0 %v1629
        %1631 = vmatprep.subr.mxu0 0.0
        %v1632 = vand.u32 %v489, 4294901760
        %v1633 = vsub.f32 %v489, %v1632
        %1634 = vmatpush1.msra.mxu0 %v1633
        %1635 = vmatprep.subr.mxu0 0.0
        %v1636 = vand.u32 %v488, 4294901760
        %v1637 = vsub.f32 %v488, %v1636
        %1638 = vmatpush1.msra.mxu0 %v1637
        %1639 = vmatprep.subr.mxu0 0.0
        %v1640 = vand.u32 %v487, 4294901760
        %v1641 = vsub.f32 %v487, %v1640
        %1642 = vmatpush1.msra.mxu0 %v1641
        %1643 = vmatprep.subr.mxu0 0.0
        %1644 = vmatpush2.msra.mxu0 0.0
        %1645 = vmatprep.subr.mxu0 0.0
        %1646 = vmatpush2.msra.mxu0 0.0
        %1647 = vmatprep.subr.mxu0 0.0
        %1648 = vmatpush2.msra.mxu0 0.0
        %1649 = vmatprep.subr.mxu0 0.0
        %1650 = vmatpush2.msra.mxu0 0.0
        %1651 = vmatprep.subr.mxu0 0.0
        %1652 = vmatpush2.msra.mxu0 0.0
        %1653 = vmatprep.subr.mxu0 0.0
        %1654 = vmatpush2.msra.mxu0 0.0
        %1655 = vmatprep.subr.mxu0 0.0
        %1656 = vmatpush2.msra.mxu0 0.0
        %1657 = vmatprep.subr.mxu0 0.0
        %1658 = vmatpush2.msra.mxu0 0.0
        %1659 = vmatprep.subr.mxu0 0.0
        %1660 = vmatpush2.msra.mxu0 0.0
        %1661 = vmatprep.subr.mxu0 0.0
        %1662 = vmatpush2.msra.mxu0 0.0
        %1663 = vmatprep.subr.mxu0 0.0
        %1664 = vmatpush2.msra.mxu0 0.0
        %1665 = vmatprep.subr.mxu0 0.0
        %1666 = vmatpush2.msra.mxu0 0.0
        %1667 = vmatprep.subr.mxu0 0.0
        %1668 = vmatpush2.msra.mxu0 0.0
        %1669 = vmatprep.subr.mxu0 0.0
        %1670 = vmatpush2.msra.mxu0 0.0
        %1671 = vmatprep.subr.mxu0 0.0
        %1672 = vmatpush2.msra.mxu0 0.0
        %1673 = vmatprep.subr.mxu0 0.0
        %1674 = vmatpush2.msra.mxu0 0.0
        %1675 = vmatprep.mubr.f32.mxu0 0.0
        %v1676 = vand.u32 %v275, 4294901760
        %v1677 = vsub.f32 %v275, %v1676
        %1678 = vmatmul.mubr.f32.gmra.mxu0 %v1677
        %v1679 = vpop.f32.mrf.mxu0
        %v1680 = vadd.f32 %v1558, %v1679
        %v1681 = vpop.f32.mrf.mxu0
        %1682 = vmatprep.mubr.f32.mxu0 0.0
        %v1683 = vand.u32 %v276, 4294901760
        %v1684 = vsub.f32 %v276, %v1683
        %1685 = vmatmul.mubr.f32.gmra.mxu0 %v1684
        %v1686 = vpop.f32.mrf.mxu0
        %v1687 = vadd.f32 %v1564, %v1686
        %v1688 = vpop.f32.mrf.mxu0
        %1689 = vmatprep.mubr.f32.mxu0 0.0
        %v1690 = vand.u32 %v277, 4294901760
        %v1691 = vsub.f32 %v277, %v1690
        %1692 = vmatmul.mubr.f32.gmra.mxu0 %v1691
        %v1693 = vpop.f32.mrf.mxu0
        %v1694 = vadd.f32 %v1570, %v1693
        %v1695 = vpop.f32.mrf.mxu0
        %1696 = vmatprep.mubr.f32.mxu0 0.0
        %v1697 = vand.u32 %v278, 4294901760
        %v1698 = vsub.f32 %v278, %v1697
        %1699 = vmatmul.mubr.f32.gmra.mxu0 %v1698
        %v1700 = vpop.f32.mrf.mxu0
        %v1701 = vadd.f32 %v1576, %v1700
        %v1702 = vpop.f32.mrf.mxu0
        %1703 = vdwg.mxu0
        %1704 = vmatprep.subr.mxu0 0.0
        %v1705 = vand.u32 %v502, 4294901760
        %1706 = vmatpush1.msra.mxu0 %v1705
        %1707 = vmatprep.subr.mxu0 0.0
        %v1708 = vand.u32 %v501, 4294901760
        %1709 = vmatpush1.msra.mxu0 %v1708
        %1710 = vmatprep.subr.mxu0 0.0
        %v1711 = vand.u32 %v500, 4294901760
        %1712 = vmatpush1.msra.mxu0 %v1711
        %1713 = vmatprep.subr.mxu0 0.0
        %v1714 = vand.u32 %v499, 4294901760
        %1715 = vmatpush1.msra.mxu0 %v1714
        %1716 = vmatprep.subr.mxu0 0.0
        %v1717 = vand.u32 %v498, 4294901760
        %1718 = vmatpush1.msra.mxu0 %v1717
        %1719 = vmatprep.subr.mxu0 0.0
        %v1720 = vand.u32 %v497, 4294901760
        %1721 = vmatpush1.msra.mxu0 %v1720
        %1722 = vmatprep.subr.mxu0 0.0
        %v1723 = vand.u32 %v496, 4294901760
        %1724 = vmatpush1.msra.mxu0 %v1723
        %1725 = vmatprep.subr.mxu0 0.0
        %v1726 = vand.u32 %v495, 4294901760
        %1727 = vmatpush1.msra.mxu0 %v1726
        %1728 = vmatprep.subr.mxu0 0.0
        %v1729 = vand.u32 %v494, 4294901760
        %1730 = vmatpush1.msra.mxu0 %v1729
        %1731 = vmatprep.subr.mxu0 0.0
        %v1732 = vand.u32 %v493, 4294901760
        %1733 = vmatpush1.msra.mxu0 %v1732
        %1734 = vmatprep.subr.mxu0 0.0
        %v1735 = vand.u32 %v492, 4294901760
        %1736 = vmatpush1.msra.mxu0 %v1735
        %1737 = vmatprep.subr.mxu0 0.0
        %v1738 = vand.u32 %v491, 4294901760
        %1739 = vmatpush1.msra.mxu0 %v1738
        %1740 = vmatprep.subr.mxu0 0.0
        %v1741 = vand.u32 %v490, 4294901760
        %1742 = vmatpush1.msra.mxu0 %v1741
        %1743 = vmatprep.subr.mxu0 0.0
        %v1744 = vand.u32 %v489, 4294901760
        %1745 = vmatpush1.msra.mxu0 %v1744
        %1746 = vmatprep.subr.mxu0 0.0
        %v1747 = vand.u32 %v488, 4294901760
        %1748 = vmatpush1.msra.mxu0 %v1747
        %1749 = vmatprep.subr.mxu0 0.0
        %v1750 = vand.u32 %v487, 4294901760
        %1751 = vmatpush1.msra.mxu0 %v1750
        %1752 = vmatprep.subr.mxu0 0.0
        %1753 = vmatpush2.msra.mxu0 0.0
        %1754 = vmatprep.subr.mxu0 0.0
        %1755 = vmatpush2.msra.mxu0 0.0
        %1756 = vmatprep.subr.mxu0 0.0
        %1757 = vmatpush2.msra.mxu0 0.0
        %1758 = vmatprep.subr.mxu0 0.0
        %1759 = vmatpush2.msra.mxu0 0.0
        %1760 = vmatprep.subr.mxu0 0.0
        %1761 = vmatpush2.msra.mxu0 0.0
        %1762 = vmatprep.subr.mxu0 0.0
        %1763 = vmatpush2.msra.mxu0 0.0
        %1764 = vmatprep.subr.mxu0 0.0
        %1765 = vmatpush2.msra.mxu0 0.0
        %1766 = vmatprep.subr.mxu0 0.0
        %1767 = vmatpush2.msra.mxu0 0.0
        %1768 = vmatprep.subr.mxu0 0.0
        %1769 = vmatpush2.msra.mxu0 0.0
        %1770 = vmatprep.subr.mxu0 0.0
        %1771 = vmatpush2.msra.mxu0 0.0
        %1772 = vmatprep.subr.mxu0 0.0
        %1773 = vmatpush2.msra.mxu0 0.0
        %1774 = vmatprep.subr.mxu0 0.0
        %1775 = vmatpush2.msra.mxu0 0.0
        %1776 = vmatprep.subr.mxu0 0.0
        %1777 = vmatpush2.msra.mxu0 0.0
        %1778 = vmatprep.subr.mxu0 0.0
        %1779 = vmatpush2.msra.mxu0 0.0
        %1780 = vmatprep.subr.mxu0 0.0
        %1781 = vmatpush2.msra.mxu0 0.0
        %1782 = vmatprep.subr.mxu0 0.0
        %1783 = vmatpush2.msra.mxu0 0.0
        %1784 = vmatprep.mubr.f32.mxu0 0.0
        %v1785 = vand.u32 %v275, 4294901760
        %v1786 = vsub.f32 %v275, %v1785
        %v1787 = vand.u32 %v1786, 4294901760
        %1788 = vmatmul.mubr.f32.gmra.mxu0 %v1787
        %v1789 = vpop.f32.mrf.mxu0
        %v1790 = vadd.f32 %v1680, %v1789
        %v1791 = vpop.f32.mrf.mxu0
        %1792 = vmatprep.mubr.f32.mxu0 0.0
        %v1793 = vand.u32 %v276, 4294901760
        %v1794 = vsub.f32 %v276, %v1793
        %v1795 = vand.u32 %v1794, 4294901760
        %1796 = vmatmul.mubr.f32.gmra.mxu0 %v1795
        %v1797 = vpop.f32.mrf.mxu0
        %v1798 = vadd.f32 %v1687, %v1797
        %v1799 = vpop.f32.mrf.mxu0
        %1800 = vmatprep.mubr.f32.mxu0 0.0
        %v1801 = vand.u32 %v277, 4294901760
        %v1802 = vsub.f32 %v277, %v1801
        %v1803 = vand.u32 %v1802, 4294901760
        %1804 = vmatmul.mubr.f32.gmra.mxu0 %v1803
        %v1805 = vpop.f32.mrf.mxu0
        %v1806 = vadd.f32 %v1694, %v1805
        %v1807 = vpop.f32.mrf.mxu0
        %1808 = vmatprep.mubr.f32.mxu0 0.0
        %v1809 = vand.u32 %v278, 4294901760
        %v1810 = vsub.f32 %v278, %v1809
        %v1811 = vand.u32 %v1810, 4294901760
        %1812 = vmatmul.mubr.f32.gmra.mxu0 %v1811
        %v1813 = vpop.f32.mrf.mxu0
        %v1814 = vadd.f32 %v1701, %v1813
        %v1815 = vpop.f32.mrf.mxu0
        %1816 = vdwg.mxu0
        %1817 = vmatprep.subr.mxu0 0.0
        %v1818 = vand.u32 %v502, 4294901760
        %v1819 = vsub.f32 %v502, %v1818
        %v1820 = vand.u32 %v1819, 4294901760
        %1821 = vmatpush1.msra.mxu0 %v1820
        %1822 = vmatprep.subr.mxu0 0.0
        %v1823 = vand.u32 %v501, 4294901760
        %v1824 = vsub.f32 %v501, %v1823
        %v1825 = vand.u32 %v1824, 4294901760
        %1826 = vmatpush1.msra.mxu0 %v1825
        %1827 = vmatprep.subr.mxu0 0.0
        %v1828 = vand.u32 %v500, 4294901760
        %v1829 = vsub.f32 %v500, %v1828
        %v1830 = vand.u32 %v1829, 4294901760
        %1831 = vmatpush1.msra.mxu0 %v1830
        %1832 = vmatprep.subr.mxu0 0.0
        %v1833 = vand.u32 %v499, 4294901760
        %v1834 = vsub.f32 %v499, %v1833
        %v1835 = vand.u32 %v1834, 4294901760
        %1836 = vmatpush1.msra.mxu0 %v1835
        %1837 = vmatprep.subr.mxu0 0.0
        %v1838 = vand.u32 %v498, 4294901760
        %v1839 = vsub.f32 %v498, %v1838
        %v1840 = vand.u32 %v1839, 4294901760
        %1841 = vmatpush1.msra.mxu0 %v1840
        %1842 = vmatprep.subr.mxu0 0.0
        %v1843 = vand.u32 %v497, 4294901760
        %v1844 = vsub.f32 %v497, %v1843
        %v1845 = vand.u32 %v1844, 4294901760
        %1846 = vmatpush1.msra.mxu0 %v1845
        %1847 = vmatprep.subr.mxu0 0.0
        %v1848 = vand.u32 %v496, 4294901760
        %v1849 = vsub.f32 %v496, %v1848
        %v1850 = vand.u32 %v1849, 4294901760
        %1851 = vmatpush1.msra.mxu0 %v1850
        %1852 = vmatprep.subr.mxu0 0.0
        %v1853 = vand.u32 %v495, 4294901760
        %v1854 = vsub.f32 %v495, %v1853
        %v1855 = vand.u32 %v1854, 4294901760
        %1856 = vmatpush1.msra.mxu0 %v1855
        %1857 = vmatprep.subr.mxu0 0.0
        %v1858 = vand.u32 %v494, 4294901760
        %v1859 = vsub.f32 %v494, %v1858
        %v1860 = vand.u32 %v1859, 4294901760
        %1861 = vmatpush1.msra.mxu0 %v1860
        %1862 = vmatprep.subr.mxu0 0.0
        %v1863 = vand.u32 %v493, 4294901760
        %v1864 = vsub.f32 %v493, %v1863
        %v1865 = vand.u32 %v1864, 4294901760
        %1866 = vmatpush1.msra.mxu0 %v1865
        %1867 = vmatprep.subr.mxu0 0.0
        %v1868 = vand.u32 %v492, 4294901760
        %v1869 = vsub.f32 %v492, %v1868
        %v1870 = vand.u32 %v1869, 4294901760
        %1871 = vmatpush1.msra.mxu0 %v1870
        %1872 = vmatprep.subr.mxu0 0.0
        %v1873 = vand.u32 %v491, 4294901760
        %v1874 = vsub.f32 %v491, %v1873
        %v1875 = vand.u32 %v1874, 4294901760
        %1876 = vmatpush1.msra.mxu0 %v1875
        %1877 = vmatprep.subr.mxu0 0.0
        %v1878 = vand.u32 %v490, 4294901760
        %v1879 = vsub.f32 %v490, %v1878
        %v1880 = vand.u32 %v1879, 4294901760
        %1881 = vmatpush1.msra.mxu0 %v1880
        %1882 = vmatprep.subr.mxu0 0.0
        %v1883 = vand.u32 %v489, 4294901760
        %v1884 = vsub.f32 %v489, %v1883
        %v1885 = vand.u32 %v1884, 4294901760
        %1886 = vmatpush1.msra.mxu0 %v1885
        %1887 = vmatprep.subr.mxu0 0.0
        %v1888 = vand.u32 %v488, 4294901760
        %v1889 = vsub.f32 %v488, %v1888
        %v1890 = vand.u32 %v1889, 4294901760
        %1891 = vmatpush1.msra.mxu0 %v1890
        %1892 = vmatprep.subr.mxu0 0.0
        %v1893 = vand.u32 %v487, 4294901760
        %v1894 = vsub.f32 %v487, %v1893
        %v1895 = vand.u32 %v1894, 4294901760
        %1896 = vmatpush1.msra.mxu0 %v1895
        %1897 = vmatprep.subr.mxu0 0.0
        %1898 = vmatpush2.msra.mxu0 0.0
        %1899 = vmatprep.subr.mxu0 0.0
        %1900 = vmatpush2.msra.mxu0 0.0
        %1901 = vmatprep.subr.mxu0 0.0
        %1902 = vmatpush2.msra.mxu0 0.0
        %1903 = vmatprep.subr.mxu0 0.0
        %1904 = vmatpush2.msra.mxu0 0.0
        %1905 = vmatprep.subr.mxu0 0.0
        %1906 = vmatpush2.msra.mxu0 0.0
        %1907 = vmatprep.subr.mxu0 0.0
        %1908 = vmatpush2.msra.mxu0 0.0
        %1909 = vmatprep.subr.mxu0 0.0
        %1910 = vmatpush2.msra.mxu0 0.0
        %1911 = vmatprep.subr.mxu0 0.0
        %1912 = vmatpush2.msra.mxu0 0.0
        %1913 = vmatprep.subr.mxu0 0.0
        %1914 = vmatpush2.msra.mxu0 0.0
        %1915 = vmatprep.subr.mxu0 0.0
        %1916 = vmatpush2.msra.mxu0 0.0
        %1917 = vmatprep.subr.mxu0 0.0
        %1918 = vmatpush2.msra.mxu0 0.0
        %1919 = vmatprep.subr.mxu0 0.0
        %1920 = vmatpush2.msra.mxu0 0.0
        %1921 = vmatprep.subr.mxu0 0.0
        %1922 = vmatpush2.msra.mxu0 0.0
        %1923 = vmatprep.subr.mxu0 0.0
        %1924 = vmatpush2.msra.mxu0 0.0
        %1925 = vmatprep.subr.mxu0 0.0
        %1926 = vmatpush2.msra.mxu0 0.0
        %1927 = vmatprep.subr.mxu0 0.0
        %1928 = vmatpush2.msra.mxu0 0.0
        %1929 = vmatprep.mubr.f32.mxu0 0.0
        %v1930 = vand.u32 %v275, 4294901760
        %1931 = vmatmul.mubr.f32.gmra.mxu0 %v1930
        %v1932 = vpop.f32.mrf.mxu0
        %v1933 = vadd.f32 %v1790, %v1932
        %v1934 = vpop.f32.mrf.mxu0
        %1935 = vmatprep.mubr.f32.mxu0 0.0
        %v1936 = vand.u32 %v276, 4294901760
        %1937 = vmatmul.mubr.f32.gmra.mxu0 %v1936
        %v1938 = vpop.f32.mrf.mxu0
        %v1939 = vadd.f32 %v1798, %v1938
        %v1940 = vpop.f32.mrf.mxu0
        %1941 = vmatprep.mubr.f32.mxu0 0.0
        %v1942 = vand.u32 %v277, 4294901760
        %1943 = vmatmul.mubr.f32.gmra.mxu0 %v1942
        %v1944 = vpop.f32.mrf.mxu0
        %v1945 = vadd.f32 %v1806, %v1944
        %v1946 = vpop.f32.mrf.mxu0
        %1947 = vmatprep.mubr.f32.mxu0 0.0
        %v1948 = vand.u32 %v278, 4294901760
        %1949 = vmatmul.mubr.f32.gmra.mxu0 %v1948
        %v1950 = vpop.f32.mrf.mxu0
        %v1951 = vadd.f32 %v1814, %v1950
        %v1952 = vpop.f32.mrf.mxu0
        %1953 = vdwg.mxu0
        %1954 = vmatprep.subr.mxu0 0.0
        %v1955 = vand.u32 %v502, 4294901760
        %1956 = vmatpush1.msra.mxu0 %v1955
        %1957 = vmatprep.subr.mxu0 0.0
        %v1958 = vand.u32 %v501, 4294901760
        %1959 = vmatpush1.msra.mxu0 %v1958
        %1960 = vmatprep.subr.mxu0 0.0
        %v1961 = vand.u32 %v500, 4294901760
        %1962 = vmatpush1.msra.mxu0 %v1961
        %1963 = vmatprep.subr.mxu0 0.0
        %v1964 = vand.u32 %v499, 4294901760
        %1965 = vmatpush1.msra.mxu0 %v1964
        %1966 = vmatprep.subr.mxu0 0.0
        %v1967 = vand.u32 %v498, 4294901760
        %1968 = vmatpush1.msra.mxu0 %v1967
        %1969 = vmatprep.subr.mxu0 0.0
        %v1970 = vand.u32 %v497, 4294901760
        %1971 = vmatpush1.msra.mxu0 %v1970
        %1972 = vmatprep.subr.mxu0 0.0
        %v1973 = vand.u32 %v496, 4294901760
        %1974 = vmatpush1.msra.mxu0 %v1973
        %1975 = vmatprep.subr.mxu0 0.0
        %v1976 = vand.u32 %v495, 4294901760
        %1977 = vmatpush1.msra.mxu0 %v1976
        %1978 = vmatprep.subr.mxu0 0.0
        %v1979 = vand.u32 %v494, 4294901760
        %1980 = vmatpush1.msra.mxu0 %v1979
        %1981 = vmatprep.subr.mxu0 0.0
        %v1982 = vand.u32 %v493, 4294901760
        %1983 = vmatpush1.msra.mxu0 %v1982
        %1984 = vmatprep.subr.mxu0 0.0
        %v1985 = vand.u32 %v492, 4294901760
        %1986 = vmatpush1.msra.mxu0 %v1985
        %1987 = vmatprep.subr.mxu0 0.0
        %v1988 = vand.u32 %v491, 4294901760
        %1989 = vmatpush1.msra.mxu0 %v1988
        %1990 = vmatprep.subr.mxu0 0.0
        %v1991 = vand.u32 %v490, 4294901760
        %1992 = vmatpush1.msra.mxu0 %v1991
        %1993 = vmatprep.subr.mxu0 0.0
        %v1994 = vand.u32 %v489, 4294901760
        %1995 = vmatpush1.msra.mxu0 %v1994
        %1996 = vmatprep.subr.mxu0 0.0
        %v1997 = vand.u32 %v488, 4294901760
        %1998 = vmatpush1.msra.mxu0 %v1997
        %1999 = vmatprep.subr.mxu0 0.0
        %v2000 = vand.u32 %v487, 4294901760
        %2001 = vmatpush1.msra.mxu0 %v2000
        %2002 = vmatprep.subr.mxu0 0.0
        %2003 = vmatpush2.msra.mxu0 0.0
        %2004 = vmatprep.subr.mxu0 0.0
        %2005 = vmatpush2.msra.mxu0 0.0
        %2006 = vmatprep.subr.mxu0 0.0
        %2007 = vmatpush2.msra.mxu0 0.0
        %2008 = vmatprep.subr.mxu0 0.0
        %2009 = vmatpush2.msra.mxu0 0.0
        %2010 = vmatprep.subr.mxu0 0.0
        %2011 = vmatpush2.msra.mxu0 0.0
        %2012 = vmatprep.subr.mxu0 0.0
        %2013 = vmatpush2.msra.mxu0 0.0
        %2014 = vmatprep.subr.mxu0 0.0
        %2015 = vmatpush2.msra.mxu0 0.0
        %2016 = vmatprep.subr.mxu0 0.0
        %2017 = vmatpush2.msra.mxu0 0.0
        %2018 = vmatprep.subr.mxu0 0.0
        %2019 = vmatpush2.msra.mxu0 0.0
        %2020 = vmatprep.subr.mxu0 0.0
        %2021 = vmatpush2.msra.mxu0 0.0
        %2022 = vmatprep.subr.mxu0 0.0
        %2023 = vmatpush2.msra.mxu0 0.0
        %2024 = vmatprep.subr.mxu0 0.0
        %2025 = vmatpush2.msra.mxu0 0.0
        %2026 = vmatprep.subr.mxu0 0.0
        %2027 = vmatpush2.msra.mxu0 0.0
        %2028 = vmatprep.subr.mxu0 0.0
        %2029 = vmatpush2.msra.mxu0 0.0
        %2030 = vmatprep.subr.mxu0 0.0
        %2031 = vmatpush2.msra.mxu0 0.0
        %2032 = vmatprep.subr.mxu0 0.0
        %2033 = vmatpush2.msra.mxu0 0.0
        %2034 = vmatprep.mubr.f32.mxu0 0.0
        %v2035 = vand.u32 %v275, 4294901760
        %2036 = vmatmul.mubr.f32.gmra.mxu0 %v2035
        %v2037 = vpop.f32.mrf.mxu0
        %v2038 = vadd.f32 %v1933, %v2037
        %v2039 = vpop.f32.mrf.mxu0
        %2040 = vmatprep.mubr.f32.mxu0 0.0
        %v2041 = vand.u32 %v276, 4294901760
        %2042 = vmatmul.mubr.f32.gmra.mxu0 %v2041
        %v2043 = vpop.f32.mrf.mxu0
        %v2044 = vadd.f32 %v1939, %v2043
        %v2045 = vpop.f32.mrf.mxu0
        %2046 = vmatprep.mubr.f32.mxu0 0.0
        %v2047 = vand.u32 %v277, 4294901760
        %2048 = vmatmul.mubr.f32.gmra.mxu0 %v2047
        %v2049 = vpop.f32.mrf.mxu0
        %v2050 = vadd.f32 %v1945, %v2049
        %v2051 = vpop.f32.mrf.mxu0
        %2052 = vmatprep.mubr.f32.mxu0 0.0
        %v2053 = vand.u32 %v278, 4294901760
        %2054 = vmatmul.mubr.f32.gmra.mxu0 %v2053
        %v2055 = vpop.f32.mrf.mxu0
        %v2056 = vadd.f32 %v1951, %v2055
        %v2057 = vpop.f32.mrf.mxu0
        %2058 = vdwg.mxu0
        %v2059 = vadd.f32 %v1285, %v2038
        %v2060 = vadd.f32 %v1286, %v2044
        %v2061 = vadd.f32 %v1287, %v2050
        %v2062 = vadd.f32 %v1288, %v2056
        %2063 = vst [vmem:[#allocation3] sm:$0xff] %v2059
        %2064 = vst [vmem:[#allocation3 + $0x8] sm:$0xff] %v2060
        %2065 = vst [vmem:[#allocation3 + $0x10] sm:$0xff] %v2061
        %2066 = vst [vmem:[#allocation3 + $0x18] sm:$0xff] %v2062
        %v2067 = vld [vmem:[#allocation4] sm:$0x1]
        %v2068 = vadd.f32 %v407, %v408
        %v2069 = vadd.f32 %v2068, %v409
        %v2070 = vadd.f32 %v2069, %v410
        %v2071 = vadd.f32 %v2070, %v411
        %v2072 = vadd.f32 %v2071, %v412
        %v2073 = vadd.f32 %v2072, %v413
        %v2074 = vadd.f32 %v2073, %v414
        %v2075 = vadd.f32 %v2074, %v415
        %v2076 = vadd.f32 %v2075, %v416
        %v2077 = vadd.f32 %v2076, %v417
        %v2078 = vadd.f32 %v2077, %v418
        %v2079 = vadd.f32 %v2078, %v419
        %v2080 = vadd.f32 %v2079, %v420
        %v2081 = vadd.f32 %v2080, %v421
        %v2082 = vadd.f32 %v2081, %v422
        %v2083 = vrot.slane %v2082, 4
        %v2084 = vadd.f32 %v2082, %v2083
        %v2085 = vrot.slane %v2084, 2
        %v2086 = vadd.f32 %v2084, %v2085
        %v2087 = vrot.slane %v2086, 1
        %v2088 = vadd.f32 %v2086, %v2087
        %v2089 = vadd.f32 %v2067, %v2088
        %2090 = vst [vmem:[#allocation4] sm:$0x1] %v2089
        %v2091 = vld [vmem:[#allocation5] sm:$0x1]
        %v2092 = vadd.f32 %v487, %v488
        %v2093 = vadd.f32 %v2092, %v489
        %v2094 = vadd.f32 %v2093, %v490
        %v2095 = vadd.f32 %v2094, %v491
        %v2096 = vadd.f32 %v2095, %v492
        %v2097 = vadd.f32 %v2096, %v493
        %v2098 = vadd.f32 %v2097, %v494
        %v2099 = vadd.f32 %v2098, %v495
        %v2100 = vadd.f32 %v2099, %v496
        %v2101 = vadd.f32 %v2100, %v497
        %v2102 = vadd.f32 %v2101, %v498
        %v2103 = vadd.f32 %v2102, %v499
        %v2104 = vadd.f32 %v2103, %v500
        %v2105 = vadd.f32 %v2104, %v501
        %v2106 = vadd.f32 %v2105, %v502
        %v2107 = vrot.slane %v2106, 4
        %v2108 = vadd.f32 %v2106, %v2107
        %v2109 = vrot.slane %v2108, 2
        %v2110 = vadd.f32 %v2108, %v2109
        %v2111 = vrot.slane %v2110, 1
        %v2112 = vadd.f32 %v2110, %v2111
        %v2113 = vadd.f32 %v2091, %v2112
        %2114 = vst [vmem:[#allocation5] sm:$0x1] %v2113
        %v2115 = vld [vmem:[#allocation6] sm:$0xff]
        %v2116 = vld [vmem:[#allocation6 + $0x8] sm:$0xff]
        %v2117 = vld [vmem:[#allocation6 + $0x10] sm:$0xff]
        %v2118 = vld [vmem:[#allocation6 + $0x18] sm:$0xff]
        %2119 = vadd.xlane.f32.xlu0 %v275
        %v2120 = vpop.xlane.xlu0 %2119
        %2121 = vadd.xlane.f32.xlu0 %v276
        %v2122 = vpop.xlane.xlu0 %2121
        %2123 = vadd.xlane.f32.xlu0 %v277
        %v2124 = vpop.xlane.xlu0 %2123
        %2125 = vadd.xlane.f32.xlu0 %v278
        %v2126 = vpop.xlane.xlu0 %2125
        %v2127 = vadd.f32 %v2115, %v2120
        %v2128 = vadd.f32 %v2116, %v2122
        %v2129 = vadd.f32 %v2117, %v2124
        %v2130 = vadd.f32 %v2118, %v2126
        %vm2131 = vcmask 7168
        %2132 = vst.msk [vmem:[#allocation6] sm:$0xff] %vm2131, %v2127
        %2133 = vst.msk [vmem:[#allocation6 + $0x8] sm:$0xff] %vm2131, %v2128
        %2134 = vst.msk [vmem:[#allocation6 + $0x10] sm:$0xff] %vm2131, %v2129
        %2135 = vst.msk [vmem:[#allocation6 + $0x18] sm:$0xff] %vm2131, %v2130
        %p2136 = scmp.eq.s32.totalorder %s34, 2
        // Predicated region
        $region41: #{tpu_custom_call.1} parent=27 // pred_check
          %p2137 = pneg %p2136
        $region42: #{tpu_custom_call.1} parent=27 // pred_check_branch
          %2139 = sbr.rel (%p2137) target = $region44
        $region43: #{tpu_custom_call.1} parent=27 // pred_region
          %v2140 = vld [vmem:[#allocation4] sm:$0x1]
          %v2141 = vld [vmem:[#allocation2] sm:$0xff]
          %v2142 = vld [vmem:[#allocation2 + $0x8] sm:$0xff]
          %v2143 = vld [vmem:[#allocation2 + $0x10] sm:$0xff]
          %v2144 = vld [vmem:[#allocation2 + $0x18] sm:$0xff]
          %v2146 = vlaneseq
          %v2147 = vshrl.u32 %v2146, 7
          %v2148 = vsub.s32 0, %v2147
          %v2149 = vrot.slane %v2140, %v2148
          %v2151 = vsub.f32 %v2149, %v2141
          %v2152 = vsub.f32 %v2149, %v2142
          %v2153 = vsub.f32 %v2149, %v2143
          %v2154 = vsub.f32 %v2149, %v2144
          %v2155 = vstv %s239
          %v2156 = vmul.f32 %v2151, %v2155
          %v2157 = vmul.f32 %v2152, %v2155
          %v2158 = vmul.f32 %v2153, %v2155
          %v2159 = vmul.f32 %v2154, %v2155
          %v2160 = vld [vmem:[#allocation3] sm:$0xff]
          %v2161 = vld [vmem:[#allocation3 + $0x8] sm:$0xff]
          %v2162 = vld [vmem:[#allocation3 + $0x10] sm:$0xff]
          %v2163 = vld [vmem:[#allocation3 + $0x18] sm:$0xff]
          %v2164 = vmul.f32 %v2160, 2.0
          %v2165 = vmul.f32 %v2161, 2.0
          %v2166 = vmul.f32 %v2162, 2.0
          %v2167 = vmul.f32 %v2163, 2.0
          %v2168 = vadd.f32 %v2164, 1.0
          %v2169 = vadd.f32 %v2165, 1.0
          %v2170 = vadd.f32 %v2166, 1.0
          %v2171 = vadd.f32 %v2167, 1.0
          %v2172 = vld [vmem:[#allocation5] sm:$0x1]
          %v2173 = vld [vmem:[#allocation6] sm:$0xff]
          %v2174 = vld [vmem:[#allocation6 + $0x8] sm:$0xff]
          %v2175 = vld [vmem:[#allocation6 + $0x10] sm:$0xff]
          %v2176 = vld [vmem:[#allocation6 + $0x18] sm:$0xff]
          %v2178 = vlaneseq
          %v2179 = vshrl.u32 %v2178, 7
          %v2180 = vsub.s32 0, %v2179
          %v2181 = vrot.slane %v2172, %v2180
          %2184 = vset.pattern.permute.xlu0 0
          %2185 = vperm.xlu0 %2184, %v2173
          %v2186 = vpop.permute.xlu0 %2185
          %2189 = vset.pattern.permute.xlu0 0
          %2190 = vperm.xlu0 %2189, %v2174
          %v2191 = vpop.permute.xlu0 %2190
          %2194 = vset.pattern.permute.xlu0 0
          %2195 = vperm.xlu0 %2194, %v2175
          %v2196 = vpop.permute.xlu0 %2195
          %2199 = vset.pattern.permute.xlu0 0
          %2200 = vperm.xlu0 %2199, %v2176
          %v2201 = vpop.permute.xlu0 %2200
          %v2203 = vadd.f32 %v2181, %v2186
          %v2204 = vadd.f32 %v2181, %v2191
          %v2205 = vadd.f32 %v2181, %v2196
          %v2206 = vadd.f32 %v2181, %v2201
          %v2207 = vadd.f32 %v2203, 1.0
          %v2208 = vadd.f32 %v2204, 1.0
          %v2209 = vadd.f32 %v2205, 1.0
          %v2210 = vadd.f32 %v2206, 1.0
          %v2211 = vrcp.pop %v2207
          %v2212 = vmul.f32 %v2168, %v2211
          %v2213 = vrcp.pop %v2208
          %v2214 = vmul.f32 %v2169, %v2213
          %v2215 = vrcp.pop %v2209
          %v2216 = vmul.f32 %v2170, %v2215
          %v2217 = vrcp.pop %v2210
          %v2218 = vmul.f32 %v2171, %v2217
          %v2219 = vsub.f32 1.0, %v2212
          %v2220 = vsub.f32 1.0, %v2214
          %v2221 = vsub.f32 1.0, %v2216
          %v2222 = vsub.f32 1.0, %v2218
          %v2223 = vadd.f32 %v2156, %v2219
          %v2224 = vadd.f32 %v2157, %v2220
          %v2225 = vadd.f32 %v2158, %v2221
          %v2226 = vadd.f32 %v2159, %v2222
          %2227 = vst [vmem:[%s237] sm:$0xff] %v2223
          %2228 = vst [vmem:[%s237 + $0x8] sm:$0xff] %v2224
          %2229 = vst [vmem:[%s237 + $0x10] sm:$0xff] %v2225
          %2230 = vst [vmem:[%s237 + $0x18] sm:$0xff] %v2226
        $region44: #{tpu_custom_call.1} parent=27 // pred_fallthru
          _
        %s2231 = sand.u32 %s114, 1
        %s2232 = scalar_lea.sflag [#allocation11], %s2231
        %s2233 = sand.u32 %s114, 1
        %s2234 = smul.addr %s2233, 32
        %s2235 = scalar_lea.vmem [#allocation14], %s2234
        // Predicated region
        $region45: #{tpu_custom_call.1} parent=27 // pred_check
          %p2236 = pneg %p124
        $region46: #{tpu_custom_call.1} parent=27 // pred_check_branch
          %2238 = sbr.rel (%p2236) target = $region48
        $region47: #{tpu_custom_call.1} parent=27 // pred_region
          %s2240 = ssub.s32 512, 512
          %2241 = vsyncadd %s2232, %s2240
          %s2242 = smul.addr %s32, 4
          %s2243 = sadd.s32 %s33, %s2242
          %s2244 = smul.addr %s2243, 128
          %s2245 = scalar_lea.hbm %s3, %s2244
          %s2246 = sshll.u32 %s2235, 4
          %s2247 = int_to_ptr.vmem [resolvable:$true] %s2246
          %2252 = dma.vmem_to_hbm [thread:$0]  %s2247, 512, %s2245, %s2232, 128, 128, 8
        $region48: #{tpu_custom_call.1} parent=27 // pred_fallthru
          _
      $region28: #{tpu_custom_call.1} parent=5 // pred_fallthru
        _
      %p2253 = scmp.le.s32.totalorder 2, %s22
      // Predicated region
      $region49: #{tpu_custom_call.1} parent=5 // pred_check
        %p2254 = pneg %p2253
      $region50: #{tpu_custom_call.1} parent=5 // pred_check_branch
        %2256 = sbr.rel (%p2254) target = $region52
      $region51: #{tpu_custom_call.1} parent=5 // pred_region
        %s2257 = ssub.s32 %s22, 2
        // Predicated region
        $region53: #{tpu_custom_call.1} parent=51 // pred_check
          %p2258 = pneg %p130
        $region54: #{tpu_custom_call.1} parent=51 // pred_check_branch
          %2260 = sbr.rel (%p2258) target = $region56
        $region55: #{tpu_custom_call.1} parent=51 // pred_region
          %s2261 = sand.u32 %s115, 1
          %s2262 = scalar_lea.sflag [#allocation11], %s2261
          %s2263 = sand.u32 %s115, 1
          %s2264 = smul.addr %s2263, 32
          %s2265 = scalar_lea.vmem [#allocation14], %s2264
          %2266 = dma.done %s2262, 512
        $region56: #{tpu_custom_call.1} parent=51 // pred_fallthru
          _
      $region52: #{tpu_custom_call.1} parent=5 // pred_fallthru
        _
    $region6: #{tpu_custom_call.1} parent=1 // loop_footer
      %s26 = sadd.s32 1, %s22
    $region7: #{tpu_custom_call.1} parent=1 // loop_footer_branch
      %21 = sbr.rel target = $region3
    $region8: #{tpu_custom_call.1} parent=1 // loop_exit
      _
    %2267 = vsyncpa [#allocation10], 1
    %s2268 = scalar_lea.sflag [#allocation10], 1
    %2269 = vsyncpa %s2268, 1
    %2270 = vsyncpa [#allocation13], 1
    %s2271 = scalar_lea.sflag [#allocation13], 1
    %2272 = vsyncpa %s2271, 1
    %2273 = vsyncpa [#allocation11], 1
    %s2274 = scalar_lea.sflag [#allocation11], 1
    %2275 = vsyncpa %s2274, 1

</llo_original>
